<compile_context>
chip_gen: v5e
topology: v5e:2x2
jax: 0.10.0
libtpu: 0.0.40
codegen_flags: <defaults>
</compile_context>

<pallas_src>
import jax
import jax.numpy as jnp
from jax import lax
from jax.experimental import pallas as pl
from jax.experimental.pallas import tpu as pltpu

D_MODEL = 512
D_INTER = 256
# Rows per MXU sub-chunk inside a tile.  256 matches the 256x256 MXU on
# v6e/v7x; on v5e (4x128^2 MXU) a 256-row LHS simply takes two passes, so the
# same value is safe on all generations.
_INNER = 256


def _round_up(x, m):
    return ((x + m - 1) // m) * m


# -----------------------------------------------------------------------------
# Fused Pallas kernel (built per static row-tile size `tm`):
#   x1  = ReLU(x @ W1 + b1) @ W2 + b2      (CompositeNetwork.intermediate_layers)
#   out = (x1 + tgt) @ dec_w               (decoder stand-in projection, fused)
# Matmul operands are bf16 (native MXU rate, halved HBM read traffic);
# accumulation, bias adds and ReLU are f32; outputs stored as bf16.
# -----------------------------------------------------------------------------
def _make_fused_kernel(tm):
    n_full = tm // _INNER          # static
    rem = tm - n_full * _INNER     # static

    def kernel(x_ref, tgt_ref, w1_ref, b1_ref, w2_ref, b2_ref, dw_ref,
               x1_ref, out_ref):
        # Hoisted out of the row loop (JAX does not CSE re-loads/broadcasts).
        b1 = b1_ref[...]
        b2 = b2_ref[...]

        def compute(r0, nrows):
            x_c = x_ref[pl.ds(r0, nrows), :]                          # bf16
            # Linear(512, 256) + ReLU   (f32 accumulate / f32 epilogue)
            h = jnp.dot(x_c, w1_ref[...], preferred_element_type=jnp.float32)
            h = jnp.maximum(h + b1, 0.0)
            # Linear(256, 512)
            x1 = jnp.dot(h.astype(jnp.bfloat16), w2_ref[...],
                         preferred_element_type=jnp.float32) + b2
            x1_ref[pl.ds(r0, nrows), :] = x1.astype(x1_ref.dtype)
            # Fused decoder stand-in projection: (memory + tgt) @ dec_w
            s = x1 + tgt_ref[pl.ds(r0, nrows), :].astype(jnp.float32)
            out = jnp.dot(s.astype(jnp.bfloat16), dw_ref[...],
                          preferred_element_type=jnp.float32)
            out_ref[pl.ds(r0, nrows), :] = out.astype(out_ref.dtype)

        if n_full > 0:
            def body(c, carry):
                r0 = pl.multiple_of(c * _INNER, _INNER)
                compute(r0, _INNER)
                return carry
            # Body is 3 matmuls: big enough that loop overhead is negligible,
            # so keep it rolled (no instruction bloat / vreg pressure).
            lax.fori_loop(0, n_full, body, None)
        if rem > 0:
            compute(n_full * _INNER, rem)

    return kernel


def fused_intermediate_and_decode(mem, tgt, w1, b1, w2, b2, dec_w, *, tm=2048):
    """Apply the MLP + fused decoder projection. Returns (x1, decoder_out)."""
    batch, seq, d_model = mem.shape
    assert d_model == D_MODEL
    rows = batch * seq

    # Row-tile selection: the kernel is HBM-bound, so big tiles amortize the
    # ~0.35us per-grid-step pipeline overhead.  No wrapper-side pad: Pallas
    # handles ragged last blocks (tail rows are independent and their OOB
    # writes are discarded).  TODO(synk): per-generation default (~1024 on v5e)
    # once chip detection is plumbed in.
    tm = min(tm, _round_up(rows, 8))
    grid = pl.cdiv(rows, tm)
    if grid > 1 and grid % 2 == 1:
        # Prefer an even step count so v7x's two TensorCores stay balanced on
        # the "parallel" axis (harmless on single-TC v5e/v6e).
        tm = max(_INNER, _round_up(pl.cdiv(rows, grid + 1), _INNER))
        grid = pl.cdiv(rows, tm)

    # mem/tgt are already bf16 (encoder emits bf16) -> reshape is free metadata,
    # no extra HBM pass before the kernel.
    x2d = mem.reshape(rows, d_model)
    t2d = tgt.reshape(rows, d_model)

    w1b = w1.astype(jnp.bfloat16)
    w2b = w2.astype(jnp.bfloat16)
    dwb = dec_w.astype(jnp.bfloat16)
    b1_2d = b1.reshape(1, D_INTER).astype(jnp.float32)
    b2_2d = b2.reshape(1, D_MODEL).astype(jnp.float32)

    # VMEM budget: double-buffered bf16 x/tgt/x1/out tiles + resident weights
    # + headroom for in-kernel f32 intermediates.  Capped at 40 MiB so the same
    # code stays inside v7x's 64 MiB physical VMEM (bf16 outputs keep tm=2048
    # at ~26 MiB, so no single-buffering of the weights is needed).
    tile_bytes = 2 * 4 * tm * D_MODEL * 2                 # 2 bufs x 4 arrays x bf16
    weight_bytes = 2 * (D_MODEL * D_INTER * 2 + D_INTER * D_MODEL * 2
                        + D_MODEL * D_MODEL * 2 + (D_INTER + D_MODEL) * 4)
    vmem_limit = min(tile_bytes + weight_bytes + (8 << 20), 40 << 20)

    # Advisory cost estimate for XLA's scheduler around the custom call.
    flops = 2 * rows * (D_MODEL * D_INTER + D_INTER * D_MODEL + D_MODEL * D_MODEL)
    bytes_accessed = rows * 4 * D_MODEL * 2 + weight_bytes // 2

    x1_2d, out_2d = pl.pallas_call(
        _make_fused_kernel(tm),
        out_shape=(jax.ShapeDtypeStruct((rows, D_MODEL), jnp.bfloat16),
                   jax.ShapeDtypeStruct((rows, D_MODEL), jnp.bfloat16)),
        grid_spec=pltpu.PrefetchScalarGridSpec(
            num_scalar_prefetch=0,
            grid=(grid,),
            in_specs=[
                pl.BlockSpec((tm, D_MODEL), lambda i: (i, 0)),       # x rows (bf16)
                pl.BlockSpec((tm, D_MODEL), lambda i: (i, 0)),       # tgt rows (bf16)
                pl.BlockSpec((D_MODEL, D_INTER), lambda i: (0, 0)),  # W1 (resident)
                pl.BlockSpec((1, D_INTER), lambda i: (0, 0)),        # b1
                pl.BlockSpec((D_INTER, D_MODEL), lambda i: (0, 0)),  # W2 (resident)
                pl.BlockSpec((1, D_MODEL), lambda i: (0, 0)),        # b2
                pl.BlockSpec((D_MODEL, D_MODEL), lambda i: (0, 0)),  # dec_w (resident)
            ],
            out_specs=[
                pl.BlockSpec((tm, D_MODEL), lambda i: (i, 0)),       # x1 ("memory")
                pl.BlockSpec((tm, D_MODEL), lambda i: (i, 0)),       # decoder output
            ],
        ),
        compiler_params=pltpu.CompilerParams(
            dimension_semantics=("parallel",),
            vmem_limit_bytes=vmem_limit),
        cost_estimate=pl.CostEstimate(flops=flops, transcendentals=0,
                                      bytes_accessed=bytes_accessed),
    )(x2d, t2d, w1b, b1_2d, w2b, b2_2d, dwb)

    x1 = x1_2d.reshape(batch, seq, d_model)
    out = out_2d.reshape(batch, seq, d_model)
    return x1, out


# -----------------------------------------------------------------------------
# Stand-ins for the opaque model1 (encoder split) / model2 (decoder split).
# TODO(synk): model1/model2 architectures are not defined by CompositeNetwork;
#             deterministic linear projections are used as placeholders, and
#             the decoder projection is fused into the Pallas kernel above.
# -----------------------------------------------------------------------------
def model1_encoder(x, enc_w, tgt_w):
    # Emit bf16 directly so the cast fuses into the einsum epilogue (no extra
    # full-activation HBM pass before the Pallas kernel).
    mem = jnp.einsum("bsd,dk->bsk", x, enc_w).astype(jnp.bfloat16)
    tgt = jnp.einsum("bsd,dk->bsk", x, tgt_w).astype(jnp.bfloat16)
    return mem, tgt


# -----------------------------------------------------------------------------
# CompositeNetwork.forward equivalent
# -----------------------------------------------------------------------------
def composite_forward(x, params):
    mem, tgt = model1_encoder(x, params["enc_w"], params["tgt_w"])
    x1, dec_out = fused_intermediate_and_decode(
        mem, tgt, params["w1"], params["b1"], params["w2"], params["b2"],
        params["dec_w"])
    # model2 decoder stand-in returns a dict, like the PyTorch split would.
    return {"memory": x1, "tgt": tgt, "output": dec_out}


def init_params(key, d_in=32, d_model=D_MODEL, intermediate_dim=D_INTER):
    ks = jax.random.split(key, 7)

    # PyTorch nn.Linear default init: U(-1/sqrt(fan_in), 1/sqrt(fan_in))
    def lin(k, fan_in, fan_out):
        bound = 1.0 / jnp.sqrt(fan_in)
        kw, kb = jax.random.split(k)
        w = jax.random.uniform(kw, (fan_in, fan_out), jnp.float32, -bound, bound)
        b = jax.random.uniform(kb, (fan_out,), jnp.float32, -bound, bound)
        return w, b

    w1, b1 = lin(ks[0], d_model, intermediate_dim)
    w2, b2 = lin(ks[1], intermediate_dim, d_model)
    enc_w = jax.random.normal(ks[2], (d_in, d_model), jnp.float32) * 0.02
    tgt_w = jax.random.normal(ks[3], (d_in, d_model), jnp.float32) * 0.02
    dec_w = jax.random.normal(ks[4], (d_model, d_model), jnp.float32) * 0.02
    return {"w1": w1, "b1": b1, "w2": w2, "b2": b2,
            "enc_w": enc_w, "tgt_w": tgt_w, "dec_w": dec_w}


if __name__ == "__main__":
    key = jax.random.PRNGKey(0)
    kx, kp = jax.random.split(key)

    batch, seq, d_in = 2, 8, 32
    x = jax.random.normal(kx, (batch, seq, d_in), jnp.float32)
    params = init_params(kp, d_in=d_in)

    fwd = jax.jit(composite_forward)
    out = fwd(x, params)
    jax.block_until_ready(out)

    # Pure-JAX f32 reference.  Kernel matmul operands/outputs are bf16, so
    # tolerances are bf16-scale.  (Reference fixed: full (x1 + tgt) @ dec_w
    # matmul, matching the kernel, not a diagonal einsum.)
    mem, tgt = model1_encoder(x, params["enc_w"], params["tgt_w"])
    mem32 = mem.astype(jnp.float32)
    tgt32 = tgt.astype(jnp.float32)
    ref_x1 = jnp.maximum(mem32 @ params["w1"] + params["b1"], 0.0) @ params["w2"] \
        + params["b2"]
    ref_out = jnp.einsum("bsd,dk->bsk", ref_x1 + tgt32, params["dec_w"])

    assert out["memory"].shape == mem.shape
    assert out["output"].shape == mem.shape
    assert jnp.allclose(out["memory"].astype(jnp.float32), ref_x1,
                        atol=2e-2, rtol=2e-2)
    assert jnp.allclose(out["output"].astype(jnp.float32), ref_out,
                        atol=2e-2, rtol=2e-2)
    assert jnp.allclose(out["tgt"].astype(jnp.float32), tgt32,
                        atol=1e-5, rtol=1e-5)

    print("KERNEL_OK")
</pallas_src>

<mosaic_0001>
module attributes {stable_mosaic.version = 11 : i64} {
  func.func @kernel(%arg0: i32, %arg1: memref<16x512xbf16, #tpu.memory_space<vmem>>, %arg2: memref<16x512xbf16, #tpu.memory_space<vmem>>, %arg3: memref<512x256xbf16, #tpu.memory_space<vmem>>, %arg4: memref<1x256xf32, #tpu.memory_space<vmem>>, %arg5: memref<256x512xbf16, #tpu.memory_space<vmem>>, %arg6: memref<1x512xf32, #tpu.memory_space<vmem>>, %arg7: memref<512x512xbf16, #tpu.memory_space<vmem>>, %arg8: memref<16x512xbf16, #tpu.memory_space<vmem>>, %arg9: memref<16x512xbf16, #tpu.memory_space<vmem>>) attributes {dimension_semantics = [#tpu.dimension_semantics<parallel>], iteration_bounds = array<i64: 1>, scalar_prefetch = 0 : i64, scratch_operands = 0 : i64, tpu.core_type = #tpu.core_type<tc>, window_params = [{transform_indices = @transform_0, window_bounds = array<i64: 16, 512>}, {transform_indices = @transform_1, window_bounds = array<i64: 16, 512>}, {pipeline_mode = #tpu.pipeline_mode<synchronous>, transform_indices = @transform_2, window_bounds = array<i64: 512, 256>}, {pipeline_mode = #tpu.pipeline_mode<synchronous>, transform_indices = @transform_3, window_bounds = array<i64: 1, 256>}, {pipeline_mode = #tpu.pipeline_mode<synchronous>, transform_indices = @transform_4, window_bounds = array<i64: 256, 512>}, {pipeline_mode = #tpu.pipeline_mode<synchronous>, transform_indices = @transform_5, window_bounds = array<i64: 1, 512>}, {pipeline_mode = #tpu.pipeline_mode<synchronous>, transform_indices = @transform_6, window_bounds = array<i64: 512, 512>}, {transform_indices = @transform_7, window_bounds = array<i64: 16, 512>}, {transform_indices = @transform_8, window_bounds = array<i64: 16, 512>}]} {
    %c0 = arith.constant 0 : index
    %c0_0 = arith.constant 0 : index
    %0 = vector.load %arg4[%c0, %c0_0] : memref<1x256xf32, #tpu.memory_space<vmem>>, vector<1x256xf32>
    %c0_1 = arith.constant 0 : index
    %c0_2 = arith.constant 0 : index
    %1 = vector.load %arg6[%c0_1, %c0_2] : memref<1x512xf32, #tpu.memory_space<vmem>>, vector<1x512xf32>
    %c0_3 = arith.constant 0 : index
    %c0_4 = arith.constant 0 : index
    %2 = vector.load %arg1[%c0_3, %c0_4] : memref<16x512xbf16, #tpu.memory_space<vmem>>, vector<16x512xbf16>
    %c0_5 = arith.constant 0 : index
    %c0_6 = arith.constant 0 : index
    %3 = vector.load %arg3[%c0_5, %c0_6] : memref<512x256xbf16, #tpu.memory_space<vmem>>, vector<512x256xbf16>
    %cst = arith.constant dense<0.000000e+00> : vector<16x256xf32>
    %4 = tpu.matmul %2, %3, %cst {dimension_numbers = #tpu.dot_dimension_numbers<[1], [0], [0], [1], [0, 0, 1, 1], [], []>} : vector<16x512xbf16>, vector<512x256xbf16>, vector<16x256xf32> -> vector<16x256xf32>
    %5 = vector.broadcast %0 : vector<1x256xf32> to vector<16x256xf32>
    %6 = arith.addf %4, %5 : vector<16x256xf32>
    %cst_7 = arith.constant 0.000000e+00 : f32
    %7 = vector.broadcast %cst_7 : f32 to vector<16x256xf32>
    %8 = arith.maximumf %6, %7 : vector<16x256xf32>
    %9 = arith.truncf %8 : vector<16x256xf32> to vector<16x256xbf16>
    %c0_8 = arith.constant 0 : index
    %c0_9 = arith.constant 0 : index
    %10 = vector.load %arg5[%c0_8, %c0_9] : memref<256x512xbf16, #tpu.memory_space<vmem>>, vector<256x512xbf16>
    %cst_10 = arith.constant dense<0.000000e+00> : vector<16x512xf32>
    %11 = tpu.matmul %9, %10, %cst_10 {dimension_numbers = #tpu.dot_dimension_numbers<[1], [0], [0], [1], [0, 0, 1, 1], [], []>} : vector<16x256xbf16>, vector<256x512xbf16>, vector<16x512xf32> -> vector<16x512xf32>
    %12 = vector.broadcast %1 : vector<1x512xf32> to vector<16x512xf32>
    %13 = arith.addf %11, %12 : vector<16x512xf32>
    %14 = arith.truncf %13 : vector<16x512xf32> to vector<16x512xbf16>
    %c0_11 = arith.constant 0 : index
    %c0_12 = arith.constant 0 : index
    %15 = vector.load %arg8[%c0_11, %c0_12] : memref<16x512xbf16, #tpu.memory_space<vmem>>, vector<16x512xbf16>
    tpu.vector_store %arg8[%c0_11, %c0_12], %14 {strides = array<i32>} : memref<16x512xbf16, #tpu.memory_space<vmem>>, vector<16x512xbf16>,
    %c0_13 = arith.constant 0 : index
    %c0_14 = arith.constant 0 : index
    %16 = vector.load %arg2[%c0_13, %c0_14] : memref<16x512xbf16, #tpu.memory_space<vmem>>, vector<16x512xbf16>
    %17 = arith.extf %16 : vector<16x512xbf16> to vector<16x512xf32>
    %18 = arith.addf %13, %17 : vector<16x512xf32>
    %19 = arith.truncf %18 : vector<16x512xf32> to vector<16x512xbf16>
    %c0_15 = arith.constant 0 : index
    %c0_16 = arith.constant 0 : index
    %20 = vector.load %arg7[%c0_15, %c0_16] : memref<512x512xbf16, #tpu.memory_space<vmem>>, vector<512x512xbf16>
    %cst_17 = arith.constant dense<0.000000e+00> : vector<16x512xf32>
    %21 = tpu.matmul %19, %20, %cst_17 {dimension_numbers = #tpu.dot_dimension_numbers<[1], [0], [0], [1], [0, 0, 1, 1], [], []>} : vector<16x512xbf16>, vector<512x512xbf16>, vector<16x512xf32> -> vector<16x512xf32>
    %22 = arith.truncf %21 : vector<16x512xf32> to vector<16x512xbf16>
    %c0_18 = arith.constant 0 : index
    %c0_19 = arith.constant 0 : index
    %23 = vector.load %arg9[%c0_18, %c0_19] : memref<16x512xbf16, #tpu.memory_space<vmem>>, vector<16x512xbf16>
    tpu.vector_store %arg9[%c0_18, %c0_19], %22 {strides = array<i32>} : memref<16x512xbf16, #tpu.memory_space<vmem>>, vector<16x512xbf16>,
    return
  }
  func.func @transform_0(%arg0: i32) -> (i32, i32) {
    %c0_i32 = arith.constant 0 : i32
    %c0_i32_0 = arith.constant 0 : i32
    return %arg0, %c0_i32 : i32, i32
  }
  func.func @transform_1(%arg0: i32) -> (i32, i32) {
    %c0_i32 = arith.constant 0 : i32
    %c0_i32_0 = arith.constant 0 : i32
    return %arg0, %c0_i32 : i32, i32
  }
  func.func @transform_2(%arg0: i32) -> (i32, i32) {
    %c0_i32 = arith.constant 0 : i32
    %c0_i32_0 = arith.constant 0 : i32
    %c0_i32_1 = arith.constant 0 : i32
    return %c0_i32, %c0_i32_0 : i32, i32
  }
  func.func @transform_3(%arg0: i32) -> (i32, i32) {
    %c0_i32 = arith.constant 0 : i32
    %c0_i32_0 = arith.constant 0 : i32
    %c0_i32_1 = arith.constant 0 : i32
    return %c0_i32, %c0_i32_0 : i32, i32
  }
  func.func @transform_4(%arg0: i32) -> (i32, i32) {
    %c0_i32 = arith.constant 0 : i32
    %c0_i32_0 = arith.constant 0 : i32
    %c0_i32_1 = arith.constant 0 : i32
    return %c0_i32, %c0_i32_0 : i32, i32
  }
  func.func @transform_5(%arg0: i32) -> (i32, i32) {
    %c0_i32 = arith.constant 0 : i32
    %c0_i32_0 = arith.constant 0 : i32
    %c0_i32_1 = arith.constant 0 : i32
    return %c0_i32, %c0_i32_0 : i32, i32
  }
  func.func @transform_6(%arg0: i32) -> (i32, i32) {
    %c0_i32 = arith.constant 0 : i32
    %c0_i32_0 = arith.constant 0 : i32
    %c0_i32_1 = arith.constant 0 : i32
    return %c0_i32, %c0_i32_0 : i32, i32
  }
  func.func @transform_7(%arg0: i32) -> (i32, i32) {
    %c0_i32 = arith.constant 0 : i32
    %c0_i32_0 = arith.constant 0 : i32
    return %arg0, %c0_i32 : i32, i32
  }
  func.func @transform_8(%arg0: i32) -> (i32, i32) {
    %c0_i32 = arith.constant 0 : i32
    %c0_i32_0 = arith.constant 0 : i32
    return %arg0, %c0_i32 : i32, i32
  }
}

</mosaic_0001>

<llo_original>
// kernel: composite_forward.1
$region0: #{composite_forward.1}
  #allocation0 [shape = 'u32[]', space=smem, size = 0x4, offset = 0x4, fixed_abs, tag = 'smem constant byte address 0x4 - core index']
  #allocation1 [shape = 'u32[72,128]{1,0:T(1,128)}', space=vmem, size = 0x9000, scoped, tag = 'internal scratch']
  %s0 = inlined_call_operand.vmem [shape: bf16[16,512], index: 0, kind: input, shape index: {}]
  %s1 = inlined_call_operand.vmem [shape: bf16[16,512], index: 1, kind: input, shape index: {}]
  %s2 = inlined_call_operand.vmem [shape: bf16[512,256], index: 2, kind: input, shape index: {}]
  %s3 = inlined_call_operand.vmem [shape: f32[1,256], index: 3, kind: input, shape index: {}]
  %s4 = inlined_call_operand.vmem [shape: bf16[256,512], index: 4, kind: input, shape index: {}]
  %s5 = inlined_call_operand.vmem [shape: f32[1,512], index: 5, kind: input, shape index: {}]
  %s6 = inlined_call_operand.vmem [shape: bf16[512,512], index: 6, kind: input, shape index: {}]
  %s7 = inlined_call_operand.hbm [shape: bf16[16,512], index: 7, kind: output, shape index: {0}]
  %s8 = inlined_call_operand.hbm [shape: bf16[16,512], index: 8, kind: output, shape index: {1}]
  %9 = xla_tuple %s7, %s8
  %s10 = sld [smem:[#allocation0]]
  $region46: #{composite_forward.1} parent=0
    _
  %s12 = ssub.s32 1, %s10
  %s13 = scalar_select 0, %s12, %s10
  $region1: #{composite_forward.1} parent=0
    #allocation2 [shape = 'u8[16384]{0}', space=vmem, size = 0x4000, scoped, tag = 'output window, operand 0, single buffered']
    #allocation3 [shape = 's32[1]{0}', space=sflag, size = 0x4, scoped, tag = 'scoped memory for composite_forward.1']
    #allocation4 [shape = 'u8[16384]{0}', space=vmem, size = 0x4000, scoped, tag = 'output window, operand 1, single buffered']
    #allocation5 [shape = 's32[1]{0}', space=sflag, size = 0x4, scoped, tag = 'scoped memory for composite_forward.1']
    %14 = vsyncpa [#allocation3], 0
    %15 = vsyncpa [#allocation5], 0
    // Predicated region
    $region2: #{composite_forward.1} parent=1 // pred_check
      _
    $region3: #{composite_forward.1} parent=1 // pred_check_branch
      %17 = sbr.rel (0) target = $region5
    $region4: #{composite_forward.1} parent=1 // pred_region
      _
    $region5: #{composite_forward.1} parent=1 // pred_fallthru
      _
    // Predicated region
    $region6: #{composite_forward.1} parent=1 // pred_check
      _
    $region7: #{composite_forward.1} parent=1 // pred_check_branch
      %19 = sbr.rel (0) target = $region9
    $region8: #{composite_forward.1} parent=1 // pred_region
      _
    $region9: #{composite_forward.1} parent=1 // pred_fallthru
      _
    // Predicated region
    $region10: #{composite_forward.1} parent=1 // pred_check
      _
    $region11: #{composite_forward.1} parent=1 // pred_check_branch
      %21 = sbr.rel (0) target = $region13
    $region12: #{composite_forward.1} parent=1 // pred_region
      _
    $region13: #{composite_forward.1} parent=1 // pred_fallthru
      _
    // Predicated region
    $region14: #{composite_forward.1} parent=1 // pred_check
      _
    $region15: #{composite_forward.1} parent=1 // pred_check_branch
      %23 = sbr.rel (0) target = $region17
    $region16: #{composite_forward.1} parent=1 // pred_region
      _
    $region17: #{composite_forward.1} parent=1 // pred_fallthru
      _
    // Predicated region
    $region18: #{composite_forward.1} parent=1 // pred_check
      _
    $region19: #{composite_forward.1} parent=1 // pred_check_branch
      %25 = sbr.rel (0) target = $region21
    $region20: #{composite_forward.1} parent=1 // pred_region
      _
    $region21: #{composite_forward.1} parent=1 // pred_fallthru
      _
    // Predicated region
    $region22: #{composite_forward.1} parent=1 // pred_check
      _
    $region23: #{composite_forward.1} parent=1 // pred_check_branch
      %27 = sbr.rel (0) target = $region25
    $region24: #{composite_forward.1} parent=1 // pred_region
      _
    $region25: #{composite_forward.1} parent=1 // pred_fallthru
      _
    // Predicated region
    $region26: #{composite_forward.1} parent=1 // pred_check
      _
    $region27: #{composite_forward.1} parent=1 // pred_check_branch
      %29 = sbr.rel (0) target = $region29
    $region28: #{composite_forward.1} parent=1 // pred_region
      _
    $region29: #{composite_forward.1} parent=1 // pred_fallthru
      _
    %v30 = vld [vmem:[%s3] sm:$0x3]
    %v31 = vld [vmem:[%s5] sm:$0xf]
    %v32 = vld [vmem:[%s0] sm:$0xff]
    %v33 = vld [vmem:[%s0 + $0x8] sm:$0xff]
    %v34 = vld [vmem:[%s0 + $0x10] sm:$0xff]
    %v35 = vld [vmem:[%s0 + $0x18] sm:$0xff]
    %v36 = vld [vmem:[%s2] sm:$0xff]
    %v37 = vld [vmem:[%s2 + $0x8] sm:$0xff]
    %v38 = vld [vmem:[%s2 + $0x10] sm:$0xff]
    %v39 = vld [vmem:[%s2 + $0x18] sm:$0xff]
    %v40 = vld [vmem:[%s2 + $0x20] sm:$0xff]
    %v41 = vld [vmem:[%s2 + $0x28] sm:$0xff]
    %v42 = vld [vmem:[%s2 + $0x30] sm:$0xff]
    %v43 = vld [vmem:[%s2 + $0x38] sm:$0xff]
    %v44 = vld [vmem:[%s2 + $0x40] sm:$0xff]
    %v45 = vld [vmem:[%s2 + $0x48] sm:$0xff]
    %v46 = vld [vmem:[%s2 + $0x50] sm:$0xff]
    %v47 = vld [vmem:[%s2 + $0x58] sm:$0xff]
    %v48 = vld [vmem:[%s2 + $0x60] sm:$0xff]
    %v49 = vld [vmem:[%s2 + $0x68] sm:$0xff]
    %v50 = vld [vmem:[%s2 + $0x70] sm:$0xff]
    %v51 = vld [vmem:[%s2 + $0x78] sm:$0xff]
    %v52 = vld [vmem:[%s2 + $0x80] sm:$0xff]
    %v53 = vld [vmem:[%s2 + $0x88] sm:$0xff]
    %v54 = vld [vmem:[%s2 + $0x90] sm:$0xff]
    %v55 = vld [vmem:[%s2 + $0x98] sm:$0xff]
    %v56 = vld [vmem:[%s2 + $0xa0] sm:$0xff]
    %v57 = vld [vmem:[%s2 + $0xa8] sm:$0xff]
    %v58 = vld [vmem:[%s2 + $0xb0] sm:$0xff]
    %v59 = vld [vmem:[%s2 + $0xb8] sm:$0xff]
    %v60 = vld [vmem:[%s2 + $0xc0] sm:$0xff]
    %v61 = vld [vmem:[%s2 + $0xc8] sm:$0xff]
    %v62 = vld [vmem:[%s2 + $0xd0] sm:$0xff]
    %v63 = vld [vmem:[%s2 + $0xd8] sm:$0xff]
    %v64 = vld [vmem:[%s2 + $0xe0] sm:$0xff]
    %v65 = vld [vmem:[%s2 + $0xe8] sm:$0xff]
    %v66 = vld [vmem:[%s2 + $0xf0] sm:$0xff]
    %v67 = vld [vmem:[%s2 + $0xf8] sm:$0xff]
    %v68 = vld [vmem:[%s2 + $0x100] sm:$0xff]
    %v69 = vld [vmem:[%s2 + $0x108] sm:$0xff]
    %v70 = vld [vmem:[%s2 + $0x110] sm:$0xff]
    %v71 = vld [vmem:[%s2 + $0x118] sm:$0xff]
    %v72 = vld [vmem:[%s2 + $0x120] sm:$0xff]
    %v73 = vld [vmem:[%s2 + $0x128] sm:$0xff]
    %v74 = vld [vmem:[%s2 + $0x130] sm:$0xff]
    %v75 = vld [vmem:[%s2 + $0x138] sm:$0xff]
    %v76 = vld [vmem:[%s2 + $0x140] sm:$0xff]
    %v77 = vld [vmem:[%s2 + $0x148] sm:$0xff]
    %v78 = vld [vmem:[%s2 + $0x150] sm:$0xff]
    %v79 = vld [vmem:[%s2 + $0x158] sm:$0xff]
    %v80 = vld [vmem:[%s2 + $0x160] sm:$0xff]
    %v81 = vld [vmem:[%s2 + $0x168] sm:$0xff]
    %v82 = vld [vmem:[%s2 + $0x170] sm:$0xff]
    %v83 = vld [vmem:[%s2 + $0x178] sm:$0xff]
    %v84 = vld [vmem:[%s2 + $0x180] sm:$0xff]
    %v85 = vld [vmem:[%s2 + $0x188] sm:$0xff]
    %v86 = vld [vmem:[%s2 + $0x190] sm:$0xff]
    %v87 = vld [vmem:[%s2 + $0x198] sm:$0xff]
    %v88 = vld [vmem:[%s2 + $0x1a0] sm:$0xff]
    %v89 = vld [vmem:[%s2 + $0x1a8] sm:$0xff]
    %v90 = vld [vmem:[%s2 + $0x1b0] sm:$0xff]
    %v91 = vld [vmem:[%s2 + $0x1b8] sm:$0xff]
    %v92 = vld [vmem:[%s2 + $0x1c0] sm:$0xff]
    %v93 = vld [vmem:[%s2 + $0x1c8] sm:$0xff]
    %v94 = vld [vmem:[%s2 + $0x1d0] sm:$0xff]
    %v95 = vld [vmem:[%s2 + $0x1d8] sm:$0xff]
    %v96 = vld [vmem:[%s2 + $0x1e0] sm:$0xff]
    %v97 = vld [vmem:[%s2 + $0x1e8] sm:$0xff]
    %v98 = vld [vmem:[%s2 + $0x1f0] sm:$0xff]
    %v99 = vld [vmem:[%s2 + $0x1f8] sm:$0xff]
    %v101 = vperm.slane %v30, 0
    %v102 = vperm.slane %v30, 1
    %v109 = vunpack.c.l.b16 %v32
    %v110 = vunpack.c.h.b16 %v32
    %v111 = vunpack.c.l.b16 %v33
    %v112 = vunpack.c.h.b16 %v33
    %v113 = vunpack.c.l.b16 %v34
    %v114 = vunpack.c.h.b16 %v34
    %v115 = vunpack.c.l.b16 %v35
    %v116 = vunpack.c.h.b16 %v35
    %v117 = vpack.c.b16 %v113, %v109
    %v118 = vpack.c.b16 %v114, %v110
    %v119 = vpack.c.b16 %v115, %v111
    %v120 = vpack.c.b16 %v116, %v112
    %v189 = vunpack.c.l.b16 %v36
    %v190 = vunpack.c.h.b16 %v36
    %v191 = vunpack.c.l.b16 %v37
    %v192 = vunpack.c.h.b16 %v37
    %v193 = vunpack.c.l.b16 %v38
    %v194 = vunpack.c.h.b16 %v38
    %v195 = vunpack.c.l.b16 %v39
    %v196 = vunpack.c.h.b16 %v39
    %v197 = vunpack.c.l.b16 %v40
    %v198 = vunpack.c.h.b16 %v40
    %v199 = vunpack.c.l.b16 %v41
    %v200 = vunpack.c.h.b16 %v41
    %v201 = vunpack.c.l.b16 %v42
    %v202 = vunpack.c.h.b16 %v42
    %v203 = vunpack.c.l.b16 %v43
    %v204 = vunpack.c.h.b16 %v43
    %v205 = vunpack.c.l.b16 %v44
    %v206 = vunpack.c.h.b16 %v44
    %v207 = vunpack.c.l.b16 %v45
    %v208 = vunpack.c.h.b16 %v45
    %v209 = vunpack.c.l.b16 %v46
    %v210 = vunpack.c.h.b16 %v46
    %v211 = vunpack.c.l.b16 %v47
    %v212 = vunpack.c.h.b16 %v47
    %v213 = vunpack.c.l.b16 %v48
    %v214 = vunpack.c.h.b16 %v48
    %v215 = vunpack.c.l.b16 %v49
    %v216 = vunpack.c.h.b16 %v49
    %v217 = vunpack.c.l.b16 %v50
    %v218 = vunpack.c.h.b16 %v50
    %v219 = vunpack.c.l.b16 %v51
    %v220 = vunpack.c.h.b16 %v51
    %v221 = vunpack.c.l.b16 %v52
    %v222 = vunpack.c.h.b16 %v52
    %v223 = vunpack.c.l.b16 %v53
    %v224 = vunpack.c.h.b16 %v53
    %v225 = vunpack.c.l.b16 %v54
    %v226 = vunpack.c.h.b16 %v54
    %v227 = vunpack.c.l.b16 %v55
    %v228 = vunpack.c.h.b16 %v55
    %v229 = vunpack.c.l.b16 %v56
    %v230 = vunpack.c.h.b16 %v56
    %v231 = vunpack.c.l.b16 %v57
    %v232 = vunpack.c.h.b16 %v57
    %v233 = vunpack.c.l.b16 %v58
    %v234 = vunpack.c.h.b16 %v58
    %v235 = vunpack.c.l.b16 %v59
    %v236 = vunpack.c.h.b16 %v59
    %v237 = vunpack.c.l.b16 %v60
    %v238 = vunpack.c.h.b16 %v60
    %v239 = vunpack.c.l.b16 %v61
    %v240 = vunpack.c.h.b16 %v61
    %v241 = vunpack.c.l.b16 %v62
    %v242 = vunpack.c.h.b16 %v62
    %v243 = vunpack.c.l.b16 %v63
    %v244 = vunpack.c.h.b16 %v63
    %v245 = vunpack.c.l.b16 %v64
    %v246 = vunpack.c.h.b16 %v64
    %v247 = vunpack.c.l.b16 %v65
    %v248 = vunpack.c.h.b16 %v65
    %v249 = vunpack.c.l.b16 %v66
    %v250 = vunpack.c.h.b16 %v66
    %v251 = vunpack.c.l.b16 %v67
    %v252 = vunpack.c.h.b16 %v67
    %v253 = vunpack.c.l.b16 %v68
    %v254 = vunpack.c.h.b16 %v68
    %v255 = vunpack.c.l.b16 %v69
    %v256 = vunpack.c.h.b16 %v69
    %v257 = vunpack.c.l.b16 %v70
    %v258 = vunpack.c.h.b16 %v70
    %v259 = vunpack.c.l.b16 %v71
    %v260 = vunpack.c.h.b16 %v71
    %v261 = vunpack.c.l.b16 %v72
    %v262 = vunpack.c.h.b16 %v72
    %v263 = vunpack.c.l.b16 %v73
    %v264 = vunpack.c.h.b16 %v73
    %v265 = vunpack.c.l.b16 %v74
    %v266 = vunpack.c.h.b16 %v74
    %v267 = vunpack.c.l.b16 %v75
    %v268 = vunpack.c.h.b16 %v75
    %v269 = vunpack.c.l.b16 %v76
    %v270 = vunpack.c.h.b16 %v76
    %v271 = vunpack.c.l.b16 %v77
    %v272 = vunpack.c.h.b16 %v77
    %v273 = vunpack.c.l.b16 %v78
    %v274 = vunpack.c.h.b16 %v78
    %v275 = vunpack.c.l.b16 %v79
    %v276 = vunpack.c.h.b16 %v79
    %v277 = vunpack.c.l.b16 %v80
    %v278 = vunpack.c.h.b16 %v80
    %v279 = vunpack.c.l.b16 %v81
    %v280 = vunpack.c.h.b16 %v81
    %v281 = vunpack.c.l.b16 %v82
    %v282 = vunpack.c.h.b16 %v82
    %v283 = vunpack.c.l.b16 %v83
    %v284 = vunpack.c.h.b16 %v83
    %v285 = vunpack.c.l.b16 %v84
    %v286 = vunpack.c.h.b16 %v84
    %v287 = vunpack.c.l.b16 %v85
    %v288 = vunpack.c.h.b16 %v85
    %v289 = vunpack.c.l.b16 %v86
    %v290 = vunpack.c.h.b16 %v86
    %v291 = vunpack.c.l.b16 %v87
    %v292 = vunpack.c.h.b16 %v87
    %v293 = vunpack.c.l.b16 %v88
    %v294 = vunpack.c.h.b16 %v88
    %v295 = vunpack.c.l.b16 %v89
    %v296 = vunpack.c.h.b16 %v89
    %v297 = vunpack.c.l.b16 %v90
    %v298 = vunpack.c.h.b16 %v90
    %v299 = vunpack.c.l.b16 %v91
    %v300 = vunpack.c.h.b16 %v91
    %v301 = vunpack.c.l.b16 %v92
    %v302 = vunpack.c.h.b16 %v92
    %v303 = vunpack.c.l.b16 %v93
    %v304 = vunpack.c.h.b16 %v93
    %v305 = vunpack.c.l.b16 %v94
    %v306 = vunpack.c.h.b16 %v94
    %v307 = vunpack.c.l.b16 %v95
    %v308 = vunpack.c.h.b16 %v95
    %v309 = vunpack.c.l.b16 %v96
    %v310 = vunpack.c.h.b16 %v96
    %v311 = vunpack.c.l.b16 %v97
    %v312 = vunpack.c.h.b16 %v97
    %v313 = vunpack.c.l.b16 %v98
    %v314 = vunpack.c.h.b16 %v98
    %v315 = vunpack.c.l.b16 %v99
    %v316 = vunpack.c.h.b16 %v99
    %v317 = vpack.c.b16 %v191, %v189
    %v318 = vpack.c.b16 %v192, %v190
    %v319 = vpack.c.b16 %v195, %v193
    %v320 = vpack.c.b16 %v196, %v194
    %v321 = vpack.c.b16 %v199, %v197
    %v322 = vpack.c.b16 %v200, %v198
    %v323 = vpack.c.b16 %v203, %v201
    %v324 = vpack.c.b16 %v204, %v202
    %v325 = vpack.c.b16 %v207, %v205
    %v326 = vpack.c.b16 %v208, %v206
    %v327 = vpack.c.b16 %v211, %v209
    %v328 = vpack.c.b16 %v212, %v210
    %v329 = vpack.c.b16 %v215, %v213
    %v330 = vpack.c.b16 %v216, %v214
    %v331 = vpack.c.b16 %v219, %v217
    %v332 = vpack.c.b16 %v220, %v218
    %v333 = vpack.c.b16 %v223, %v221
    %v334 = vpack.c.b16 %v224, %v222
    %v335 = vpack.c.b16 %v227, %v225
    %v336 = vpack.c.b16 %v228, %v226
    %v337 = vpack.c.b16 %v231, %v229
    %v338 = vpack.c.b16 %v232, %v230
    %v339 = vpack.c.b16 %v235, %v233
    %v340 = vpack.c.b16 %v236, %v234
    %v341 = vpack.c.b16 %v239, %v237
    %v342 = vpack.c.b16 %v240, %v238
    %v343 = vpack.c.b16 %v243, %v241
    %v344 = vpack.c.b16 %v244, %v242
    %v345 = vpack.c.b16 %v247, %v245
    %v346 = vpack.c.b16 %v248, %v246
    %v347 = vpack.c.b16 %v251, %v249
    %v348 = vpack.c.b16 %v252, %v250
    %v349 = vpack.c.b16 %v255, %v253
    %v350 = vpack.c.b16 %v256, %v254
    %v351 = vpack.c.b16 %v259, %v257
    %v352 = vpack.c.b16 %v260, %v258
    %v353 = vpack.c.b16 %v263, %v261
    %v354 = vpack.c.b16 %v264, %v262
    %v355 = vpack.c.b16 %v267, %v265
    %v356 = vpack.c.b16 %v268, %v266
    %v357 = vpack.c.b16 %v271, %v269
    %v358 = vpack.c.b16 %v272, %v270
    %v359 = vpack.c.b16 %v275, %v273
    %v360 = vpack.c.b16 %v276, %v274
    %v361 = vpack.c.b16 %v279, %v277
    %v362 = vpack.c.b16 %v280, %v278
    %v363 = vpack.c.b16 %v283, %v281
    %v364 = vpack.c.b16 %v284, %v282
    %v365 = vpack.c.b16 %v287, %v285
    %v366 = vpack.c.b16 %v288, %v286
    %v367 = vpack.c.b16 %v291, %v289
    %v368 = vpack.c.b16 %v292, %v290
    %v369 = vpack.c.b16 %v295, %v293
    %v370 = vpack.c.b16 %v296, %v294
    %v371 = vpack.c.b16 %v299, %v297
    %v372 = vpack.c.b16 %v300, %v298
    %v373 = vpack.c.b16 %v303, %v301
    %v374 = vpack.c.b16 %v304, %v302
    %v375 = vpack.c.b16 %v307, %v305
    %v376 = vpack.c.b16 %v308, %v306
    %v377 = vpack.c.b16 %v311, %v309
    %v378 = vpack.c.b16 %v312, %v310
    %v379 = vpack.c.b16 %v315, %v313
    %v380 = vpack.c.b16 %v316, %v314
    %445 = vmatpush.bf16.msra.mxu0 %v331
    %446 = vmatpush.bf16.msra.mxu0 %v329
    %447 = vmatpush.bf16.msra.mxu0 %v327
    %448 = vmatpush.bf16.msra.mxu0 %v325
    %449 = vmatpush.bf16.msra.mxu0 %v323
    %450 = vmatpush.bf16.msra.mxu0 %v321
    %451 = vmatpush.bf16.msra.mxu0 %v319
    %452 = vmatpush.bf16.msra.mxu0 %v317
    %453 = vmatmul.bf16.gmra.mxu0 %v117
    %v454 = vpop.f32.mrf.mxu0
    %v455 = vadd.f32 %v101, %v454
    %v456 = vpop.f32.mrf.mxu0
    %v457 = vadd.f32 %v101, %v456
    %458 = vdwg.mxu0
    %459 = vmatpush.bf16.msra.mxu0 %v347
    %460 = vmatpush.bf16.msra.mxu0 %v345
    %461 = vmatpush.bf16.msra.mxu0 %v343
    %462 = vmatpush.bf16.msra.mxu0 %v341
    %463 = vmatpush.bf16.msra.mxu0 %v339
    %464 = vmatpush.bf16.msra.mxu0 %v337
    %465 = vmatpush.bf16.msra.mxu0 %v335
    %466 = vmatpush.bf16.msra.mxu0 %v333
    %467 = vmatmul.bf16.gmra.mxu0 %v118
    %v468 = vpop.f32.mrf.mxu0
    %v469 = vadd.f32 %v455, %v468
    %v470 = vpop.f32.mrf.mxu0
    %v471 = vadd.f32 %v457, %v470
    %472 = vdwg.mxu0
    %473 = vmatpush.bf16.msra.mxu0 %v363
    %474 = vmatpush.bf16.msra.mxu0 %v361
    %475 = vmatpush.bf16.msra.mxu0 %v359
    %476 = vmatpush.bf16.msra.mxu0 %v357
    %477 = vmatpush.bf16.msra.mxu0 %v355
    %478 = vmatpush.bf16.msra.mxu0 %v353
    %479 = vmatpush.bf16.msra.mxu0 %v351
    %480 = vmatpush.bf16.msra.mxu0 %v349
    %481 = vmatmul.bf16.gmra.mxu0 %v119
    %v482 = vpop.f32.mrf.mxu0
    %v483 = vadd.f32 %v469, %v482
    %v484 = vpop.f32.mrf.mxu0
    %v485 = vadd.f32 %v471, %v484
    %486 = vdwg.mxu0
    %487 = vmatpush.bf16.msra.mxu0 %v379
    %488 = vmatpush.bf16.msra.mxu0 %v377
    %489 = vmatpush.bf16.msra.mxu0 %v375
    %490 = vmatpush.bf16.msra.mxu0 %v373
    %491 = vmatpush.bf16.msra.mxu0 %v371
    %492 = vmatpush.bf16.msra.mxu0 %v369
    %493 = vmatpush.bf16.msra.mxu0 %v367
    %494 = vmatpush.bf16.msra.mxu0 %v365
    %495 = vmatmul.bf16.gmra.mxu0 %v120
    %v496 = vpop.f32.mrf.mxu0
    %v497 = vadd.f32 %v483, %v496
    %v498 = vpop.f32.mrf.mxu0
    %v499 = vadd.f32 %v485, %v498
    %500 = vdwg.mxu0
    %501 = vmatpush.bf16.msra.mxu0 %v332
    %502 = vmatpush.bf16.msra.mxu0 %v330
    %503 = vmatpush.bf16.msra.mxu0 %v328
    %504 = vmatpush.bf16.msra.mxu0 %v326
    %505 = vmatpush.bf16.msra.mxu0 %v324
    %506 = vmatpush.bf16.msra.mxu0 %v322
    %507 = vmatpush.bf16.msra.mxu0 %v320
    %508 = vmatpush.bf16.msra.mxu0 %v318
    %509 = vmatmul.bf16.gmra.mxu0 %v117
    %v510 = vpop.f32.mrf.mxu0
    %v511 = vadd.f32 %v102, %v510
    %v512 = vpop.f32.mrf.mxu0
    %v513 = vadd.f32 %v102, %v512
    %514 = vdwg.mxu0
    %515 = vmatpush.bf16.msra.mxu0 %v348
    %516 = vmatpush.bf16.msra.mxu0 %v346
    %517 = vmatpush.bf16.msra.mxu0 %v344
    %518 = vmatpush.bf16.msra.mxu0 %v342
    %519 = vmatpush.bf16.msra.mxu0 %v340
    %520 = vmatpush.bf16.msra.mxu0 %v338
    %521 = vmatpush.bf16.msra.mxu0 %v336
    %522 = vmatpush.bf16.msra.mxu0 %v334
    %523 = vmatmul.bf16.gmra.mxu0 %v118
    %v524 = vpop.f32.mrf.mxu0
    %v525 = vadd.f32 %v511, %v524
    %v526 = vpop.f32.mrf.mxu0
    %v527 = vadd.f32 %v513, %v526
    %528 = vdwg.mxu0
    %529 = vmatpush.bf16.msra.mxu0 %v364
    %530 = vmatpush.bf16.msra.mxu0 %v362
    %531 = vmatpush.bf16.msra.mxu0 %v360
    %532 = vmatpush.bf16.msra.mxu0 %v358
    %533 = vmatpush.bf16.msra.mxu0 %v356
    %534 = vmatpush.bf16.msra.mxu0 %v354
    %535 = vmatpush.bf16.msra.mxu0 %v352
    %536 = vmatpush.bf16.msra.mxu0 %v350
    %537 = vmatmul.bf16.gmra.mxu0 %v119
    %v538 = vpop.f32.mrf.mxu0
    %v539 = vadd.f32 %v525, %v538
    %v540 = vpop.f32.mrf.mxu0
    %v541 = vadd.f32 %v527, %v540
    %542 = vdwg.mxu0
    %543 = vmatpush.bf16.msra.mxu0 %v380
    %544 = vmatpush.bf16.msra.mxu0 %v378
    %545 = vmatpush.bf16.msra.mxu0 %v376
    %546 = vmatpush.bf16.msra.mxu0 %v374
    %547 = vmatpush.bf16.msra.mxu0 %v372
    %548 = vmatpush.bf16.msra.mxu0 %v370
    %549 = vmatpush.bf16.msra.mxu0 %v368
    %550 = vmatpush.bf16.msra.mxu0 %v366
    %551 = vmatmul.bf16.gmra.mxu0 %v120
    %v552 = vpop.f32.mrf.mxu0
    %v553 = vadd.f32 %v539, %v552
    %v554 = vpop.f32.mrf.mxu0
    %v555 = vadd.f32 %v541, %v554
    %556 = vdwg.mxu0
    %v557 = vmax.f32 %v497, 0.0
    %v558 = vmax.f32 %v553, 0.0
    %v559 = vmax.f32 %v499, 0.0
    %v560 = vmax.f32 %v555, 0.0
    %v561 = vpack.c.bf16 %v559, %v557
    %v562 = vpack.c.bf16 %v560, %v558
    %v563 = vld [vmem:[%s4] sm:$0xff]
    %v564 = vld [vmem:[%s4 + $0x8] sm:$0xff]
    %v565 = vld [vmem:[%s4 + $0x10] sm:$0xff]
    %v566 = vld [vmem:[%s4 + $0x18] sm:$0xff]
    %v567 = vld [vmem:[%s4 + $0x20] sm:$0xff]
    %v568 = vld [vmem:[%s4 + $0x28] sm:$0xff]
    %v569 = vld [vmem:[%s4 + $0x30] sm:$0xff]
    %v570 = vld [vmem:[%s4 + $0x38] sm:$0xff]
    %v571 = vld [vmem:[%s4 + $0x40] sm:$0xff]
    %v572 = vld [vmem:[%s4 + $0x48] sm:$0xff]
    %v573 = vld [vmem:[%s4 + $0x50] sm:$0xff]
    %v574 = vld [vmem:[%s4 + $0x58] sm:$0xff]
    %v575 = vld [vmem:[%s4 + $0x60] sm:$0xff]
    %v576 = vld [vmem:[%s4 + $0x68] sm:$0xff]
    %v577 = vld [vmem:[%s4 + $0x70] sm:$0xff]
    %v578 = vld [vmem:[%s4 + $0x78] sm:$0xff]
    %v579 = vld [vmem:[%s4 + $0x80] sm:$0xff]
    %v580 = vld [vmem:[%s4 + $0x88] sm:$0xff]
    %v581 = vld [vmem:[%s4 + $0x90] sm:$0xff]
    %v582 = vld [vmem:[%s4 + $0x98] sm:$0xff]
    %v583 = vld [vmem:[%s4 + $0xa0] sm:$0xff]
    %v584 = vld [vmem:[%s4 + $0xa8] sm:$0xff]
    %v585 = vld [vmem:[%s4 + $0xb0] sm:$0xff]
    %v586 = vld [vmem:[%s4 + $0xb8] sm:$0xff]
    %v587 = vld [vmem:[%s4 + $0xc0] sm:$0xff]
    %v588 = vld [vmem:[%s4 + $0xc8] sm:$0xff]
    %v589 = vld [vmem:[%s4 + $0xd0] sm:$0xff]
    %v590 = vld [vmem:[%s4 + $0xd8] sm:$0xff]
    %v591 = vld [vmem:[%s4 + $0xe0] sm:$0xff]
    %v592 = vld [vmem:[%s4 + $0xe8] sm:$0xff]
    %v593 = vld [vmem:[%s4 + $0xf0] sm:$0xff]
    %v594 = vld [vmem:[%s4 + $0xf8] sm:$0xff]
    %v595 = vld [vmem:[%s4 + $0x100] sm:$0xff]
    %v596 = vld [vmem:[%s4 + $0x108] sm:$0xff]
    %v597 = vld [vmem:[%s4 + $0x110] sm:$0xff]
    %v598 = vld [vmem:[%s4 + $0x118] sm:$0xff]
    %v599 = vld [vmem:[%s4 + $0x120] sm:$0xff]
    %v600 = vld [vmem:[%s4 + $0x128] sm:$0xff]
    %v601 = vld [vmem:[%s4 + $0x130] sm:$0xff]
    %v602 = vld [vmem:[%s4 + $0x138] sm:$0xff]
    %v603 = vld [vmem:[%s4 + $0x140] sm:$0xff]
    %v604 = vld [vmem:[%s4 + $0x148] sm:$0xff]
    %v605 = vld [vmem:[%s4 + $0x150] sm:$0xff]
    %v606 = vld [vmem:[%s4 + $0x158] sm:$0xff]
    %v607 = vld [vmem:[%s4 + $0x160] sm:$0xff]
    %v608 = vld [vmem:[%s4 + $0x168] sm:$0xff]
    %v609 = vld [vmem:[%s4 + $0x170] sm:$0xff]
    %v610 = vld [vmem:[%s4 + $0x178] sm:$0xff]
    %v611 = vld [vmem:[%s4 + $0x180] sm:$0xff]
    %v612 = vld [vmem:[%s4 + $0x188] sm:$0xff]
    %v613 = vld [vmem:[%s4 + $0x190] sm:$0xff]
    %v614 = vld [vmem:[%s4 + $0x198] sm:$0xff]
    %v615 = vld [vmem:[%s4 + $0x1a0] sm:$0xff]
    %v616 = vld [vmem:[%s4 + $0x1a8] sm:$0xff]
    %v617 = vld [vmem:[%s4 + $0x1b0] sm:$0xff]
    %v618 = vld [vmem:[%s4 + $0x1b8] sm:$0xff]
    %v619 = vld [vmem:[%s4 + $0x1c0] sm:$0xff]
    %v620 = vld [vmem:[%s4 + $0x1c8] sm:$0xff]
    %v621 = vld [vmem:[%s4 + $0x1d0] sm:$0xff]
    %v622 = vld [vmem:[%s4 + $0x1d8] sm:$0xff]
    %v623 = vld [vmem:[%s4 + $0x1e0] sm:$0xff]
    %v624 = vld [vmem:[%s4 + $0x1e8] sm:$0xff]
    %v625 = vld [vmem:[%s4 + $0x1f0] sm:$0xff]
    %v626 = vld [vmem:[%s4 + $0x1f8] sm:$0xff]
    %v628 = vperm.slane %v31, 0
    %v629 = vperm.slane %v31, 1
    %v630 = vperm.slane %v31, 2
    %v631 = vperm.slane %v31, 3
    %v700 = vunpack.c.l.b16 %v563
    %v701 = vunpack.c.h.b16 %v563
    %v702 = vunpack.c.l.b16 %v564
    %v703 = vunpack.c.h.b16 %v564
    %v704 = vunpack.c.l.b16 %v565
    %v705 = vunpack.c.h.b16 %v565
    %v706 = vunpack.c.l.b16 %v566
    %v707 = vunpack.c.h.b16 %v566
    %v708 = vunpack.c.l.b16 %v567
    %v709 = vunpack.c.h.b16 %v567
    %v710 = vunpack.c.l.b16 %v568
    %v711 = vunpack.c.h.b16 %v568
    %v712 = vunpack.c.l.b16 %v569
    %v713 = vunpack.c.h.b16 %v569
    %v714 = vunpack.c.l.b16 %v570
    %v715 = vunpack.c.h.b16 %v570
    %v716 = vunpack.c.l.b16 %v571
    %v717 = vunpack.c.h.b16 %v571
    %v718 = vunpack.c.l.b16 %v572
    %v719 = vunpack.c.h.b16 %v572
    %v720 = vunpack.c.l.b16 %v573
    %v721 = vunpack.c.h.b16 %v573
    %v722 = vunpack.c.l.b16 %v574
    %v723 = vunpack.c.h.b16 %v574
    %v724 = vunpack.c.l.b16 %v575
    %v725 = vunpack.c.h.b16 %v575
    %v726 = vunpack.c.l.b16 %v576
    %v727 = vunpack.c.h.b16 %v576
    %v728 = vunpack.c.l.b16 %v577
    %v729 = vunpack.c.h.b16 %v577
    %v730 = vunpack.c.l.b16 %v578
    %v731 = vunpack.c.h.b16 %v578
    %v732 = vunpack.c.l.b16 %v579
    %v733 = vunpack.c.h.b16 %v579
    %v734 = vunpack.c.l.b16 %v580
    %v735 = vunpack.c.h.b16 %v580
    %v736 = vunpack.c.l.b16 %v581
    %v737 = vunpack.c.h.b16 %v581
    %v738 = vunpack.c.l.b16 %v582
    %v739 = vunpack.c.h.b16 %v582
    %v740 = vunpack.c.l.b16 %v583
    %v741 = vunpack.c.h.b16 %v583
    %v742 = vunpack.c.l.b16 %v584
    %v743 = vunpack.c.h.b16 %v584
    %v744 = vunpack.c.l.b16 %v585
    %v745 = vunpack.c.h.b16 %v585
    %v746 = vunpack.c.l.b16 %v586
    %v747 = vunpack.c.h.b16 %v586
    %v748 = vunpack.c.l.b16 %v587
    %v749 = vunpack.c.h.b16 %v587
    %v750 = vunpack.c.l.b16 %v588
    %v751 = vunpack.c.h.b16 %v588
    %v752 = vunpack.c.l.b16 %v589
    %v753 = vunpack.c.h.b16 %v589
    %v754 = vunpack.c.l.b16 %v590
    %v755 = vunpack.c.h.b16 %v590
    %v756 = vunpack.c.l.b16 %v591
    %v757 = vunpack.c.h.b16 %v591
    %v758 = vunpack.c.l.b16 %v592
    %v759 = vunpack.c.h.b16 %v592
    %v760 = vunpack.c.l.b16 %v593
    %v761 = vunpack.c.h.b16 %v593
    %v762 = vunpack.c.l.b16 %v594
    %v763 = vunpack.c.h.b16 %v594
    %v764 = vunpack.c.l.b16 %v595
    %v765 = vunpack.c.h.b16 %v595
    %v766 = vunpack.c.l.b16 %v596
    %v767 = vunpack.c.h.b16 %v596
    %v768 = vunpack.c.l.b16 %v597
    %v769 = vunpack.c.h.b16 %v597
    %v770 = vunpack.c.l.b16 %v598
    %v771 = vunpack.c.h.b16 %v598
    %v772 = vunpack.c.l.b16 %v599
    %v773 = vunpack.c.h.b16 %v599
    %v774 = vunpack.c.l.b16 %v600
    %v775 = vunpack.c.h.b16 %v600
    %v776 = vunpack.c.l.b16 %v601
    %v777 = vunpack.c.h.b16 %v601
    %v778 = vunpack.c.l.b16 %v602
    %v779 = vunpack.c.h.b16 %v602
    %v780 = vunpack.c.l.b16 %v603
    %v781 = vunpack.c.h.b16 %v603
    %v782 = vunpack.c.l.b16 %v604
    %v783 = vunpack.c.h.b16 %v604
    %v784 = vunpack.c.l.b16 %v605
    %v785 = vunpack.c.h.b16 %v605
    %v786 = vunpack.c.l.b16 %v606
    %v787 = vunpack.c.h.b16 %v606
    %v788 = vunpack.c.l.b16 %v607
    %v789 = vunpack.c.h.b16 %v607
    %v790 = vunpack.c.l.b16 %v608
    %v791 = vunpack.c.h.b16 %v608
    %v792 = vunpack.c.l.b16 %v609
    %v793 = vunpack.c.h.b16 %v609
    %v794 = vunpack.c.l.b16 %v610
    %v795 = vunpack.c.h.b16 %v610
    %v796 = vunpack.c.l.b16 %v611
    %v797 = vunpack.c.h.b16 %v611
    %v798 = vunpack.c.l.b16 %v612
    %v799 = vunpack.c.h.b16 %v612
    %v800 = vunpack.c.l.b16 %v613
    %v801 = vunpack.c.h.b16 %v613
    %v802 = vunpack.c.l.b16 %v614
    %v803 = vunpack.c.h.b16 %v614
    %v804 = vunpack.c.l.b16 %v615
    %v805 = vunpack.c.h.b16 %v615
    %v806 = vunpack.c.l.b16 %v616
    %v807 = vunpack.c.h.b16 %v616
    %v808 = vunpack.c.l.b16 %v617
    %v809 = vunpack.c.h.b16 %v617
    %v810 = vunpack.c.l.b16 %v618
    %v811 = vunpack.c.h.b16 %v618
    %v812 = vunpack.c.l.b16 %v619
    %v813 = vunpack.c.h.b16 %v619
    %v814 = vunpack.c.l.b16 %v620
    %v815 = vunpack.c.h.b16 %v620
    %v816 = vunpack.c.l.b16 %v621
    %v817 = vunpack.c.h.b16 %v621
    %v818 = vunpack.c.l.b16 %v622
    %v819 = vunpack.c.h.b16 %v622
    %v820 = vunpack.c.l.b16 %v623
    %v821 = vunpack.c.h.b16 %v623
    %v822 = vunpack.c.l.b16 %v624
    %v823 = vunpack.c.h.b16 %v624
    %v824 = vunpack.c.l.b16 %v625
    %v825 = vunpack.c.h.b16 %v625
    %v826 = vunpack.c.l.b16 %v626
    %v827 = vunpack.c.h.b16 %v626
    %v828 = vpack.c.b16 %v704, %v700
    %v829 = vpack.c.b16 %v705, %v701
    %v830 = vpack.c.b16 %v706, %v702
    %v831 = vpack.c.b16 %v707, %v703
    %v832 = vpack.c.b16 %v712, %v708
    %v833 = vpack.c.b16 %v713, %v709
    %v834 = vpack.c.b16 %v714, %v710
    %v835 = vpack.c.b16 %v715, %v711
    %v836 = vpack.c.b16 %v720, %v716
    %v837 = vpack.c.b16 %v721, %v717
    %v838 = vpack.c.b16 %v722, %v718
    %v839 = vpack.c.b16 %v723, %v719
    %v840 = vpack.c.b16 %v728, %v724
    %v841 = vpack.c.b16 %v729, %v725
    %v842 = vpack.c.b16 %v730, %v726
    %v843 = vpack.c.b16 %v731, %v727
    %v844 = vpack.c.b16 %v736, %v732
    %v845 = vpack.c.b16 %v737, %v733
    %v846 = vpack.c.b16 %v738, %v734
    %v847 = vpack.c.b16 %v739, %v735
    %v848 = vpack.c.b16 %v744, %v740
    %v849 = vpack.c.b16 %v745, %v741
    %v850 = vpack.c.b16 %v746, %v742
    %v851 = vpack.c.b16 %v747, %v743
    %v852 = vpack.c.b16 %v752, %v748
    %v853 = vpack.c.b16 %v753, %v749
    %v854 = vpack.c.b16 %v754, %v750
    %v855 = vpack.c.b16 %v755, %v751
    %v856 = vpack.c.b16 %v760, %v756
    %v857 = vpack.c.b16 %v761, %v757
    %v858 = vpack.c.b16 %v762, %v758
    %v859 = vpack.c.b16 %v763, %v759
    %v860 = vpack.c.b16 %v768, %v764
    %v861 = vpack.c.b16 %v769, %v765
    %v862 = vpack.c.b16 %v770, %v766
    %v863 = vpack.c.b16 %v771, %v767
    %v864 = vpack.c.b16 %v776, %v772
    %v865 = vpack.c.b16 %v777, %v773
    %v866 = vpack.c.b16 %v778, %v774
    %v867 = vpack.c.b16 %v779, %v775
    %v868 = vpack.c.b16 %v784, %v780
    %v869 = vpack.c.b16 %v785, %v781
    %v870 = vpack.c.b16 %v786, %v782
    %v871 = vpack.c.b16 %v787, %v783
    %v872 = vpack.c.b16 %v792, %v788
    %v873 = vpack.c.b16 %v793, %v789
    %v874 = vpack.c.b16 %v794, %v790
    %v875 = vpack.c.b16 %v795, %v791
    %v876 = vpack.c.b16 %v800, %v796
    %v877 = vpack.c.b16 %v801, %v797
    %v878 = vpack.c.b16 %v802, %v798
    %v879 = vpack.c.b16 %v803, %v799
    %v880 = vpack.c.b16 %v808, %v804
    %v881 = vpack.c.b16 %v809, %v805
    %v882 = vpack.c.b16 %v810, %v806
    %v883 = vpack.c.b16 %v811, %v807
    %v884 = vpack.c.b16 %v816, %v812
    %v885 = vpack.c.b16 %v817, %v813
    %v886 = vpack.c.b16 %v818, %v814
    %v887 = vpack.c.b16 %v819, %v815
    %v888 = vpack.c.b16 %v824, %v820
    %v889 = vpack.c.b16 %v825, %v821
    %v890 = vpack.c.b16 %v826, %v822
    %v891 = vpack.c.b16 %v827, %v823
    %956 = vmatpush.bf16.msra.mxu0 %v856
    %957 = vmatpush.bf16.msra.mxu0 %v852
    %958 = vmatpush.bf16.msra.mxu0 %v848
    %959 = vmatpush.bf16.msra.mxu0 %v844
    %960 = vmatpush.bf16.msra.mxu0 %v840
    %961 = vmatpush.bf16.msra.mxu0 %v836
    %962 = vmatpush.bf16.msra.mxu0 %v832
    %963 = vmatpush.bf16.msra.mxu0 %v828
    %964 = vmatmul.bf16.gmra.mxu0 %v561
    %v965 = vpop.f32.mrf.mxu0
    %v966 = vadd.f32 %v628, %v965
    %v967 = vpop.f32.mrf.mxu0
    %v968 = vadd.f32 %v628, %v967
    %969 = vdwg.mxu0
    %970 = vmatpush.bf16.msra.mxu0 %v888
    %971 = vmatpush.bf16.msra.mxu0 %v884
    %972 = vmatpush.bf16.msra.mxu0 %v880
    %973 = vmatpush.bf16.msra.mxu0 %v876
    %974 = vmatpush.bf16.msra.mxu0 %v872
    %975 = vmatpush.bf16.msra.mxu0 %v868
    %976 = vmatpush.bf16.msra.mxu0 %v864
    %977 = vmatpush.bf16.msra.mxu0 %v860
    %978 = vmatmul.bf16.gmra.mxu0 %v562
    %v979 = vpop.f32.mrf.mxu0
    %v980 = vadd.f32 %v966, %v979
    %v981 = vpop.f32.mrf.mxu0
    %v982 = vadd.f32 %v968, %v981
    %983 = vdwg.mxu0
    %984 = vmatpush.bf16.msra.mxu0 %v857
    %985 = vmatpush.bf16.msra.mxu0 %v853
    %986 = vmatpush.bf16.msra.mxu0 %v849
    %987 = vmatpush.bf16.msra.mxu0 %v845
    %988 = vmatpush.bf16.msra.mxu0 %v841
    %989 = vmatpush.bf16.msra.mxu0 %v837
    %990 = vmatpush.bf16.msra.mxu0 %v833
    %991 = vmatpush.bf16.msra.mxu0 %v829
    %992 = vmatmul.bf16.gmra.mxu0 %v561
    %v993 = vpop.f32.mrf.mxu0
    %v994 = vadd.f32 %v629, %v993
    %v995 = vpop.f32.mrf.mxu0
    %v996 = vadd.f32 %v629, %v995
    %997 = vdwg.mxu0
    %998 = vmatpush.bf16.msra.mxu0 %v889
    %999 = vmatpush.bf16.msra.mxu0 %v885
    %1000 = vmatpush.bf16.msra.mxu0 %v881
    %1001 = vmatpush.bf16.msra.mxu0 %v877
    %1002 = vmatpush.bf16.msra.mxu0 %v873
    %1003 = vmatpush.bf16.msra.mxu0 %v869
    %1004 = vmatpush.bf16.msra.mxu0 %v865
    %1005 = vmatpush.bf16.msra.mxu0 %v861
    %1006 = vmatmul.bf16.gmra.mxu0 %v562
    %v1007 = vpop.f32.mrf.mxu0
    %v1008 = vadd.f32 %v994, %v1007
    %v1009 = vpop.f32.mrf.mxu0
    %v1010 = vadd.f32 %v996, %v1009
    %1011 = vdwg.mxu0
    %1012 = vmatpush.bf16.msra.mxu0 %v858
    %1013 = vmatpush.bf16.msra.mxu0 %v854
    %1014 = vmatpush.bf16.msra.mxu0 %v850
    %1015 = vmatpush.bf16.msra.mxu0 %v846
    %1016 = vmatpush.bf16.msra.mxu0 %v842
    %1017 = vmatpush.bf16.msra.mxu0 %v838
    %1018 = vmatpush.bf16.msra.mxu0 %v834
    %1019 = vmatpush.bf16.msra.mxu0 %v830
    %1020 = vmatmul.bf16.gmra.mxu0 %v561
    %v1021 = vpop.f32.mrf.mxu0
    %v1022 = vadd.f32 %v630, %v1021
    %v1023 = vpop.f32.mrf.mxu0
    %v1024 = vadd.f32 %v630, %v1023
    %1025 = vdwg.mxu0
    %1026 = vmatpush.bf16.msra.mxu0 %v890
    %1027 = vmatpush.bf16.msra.mxu0 %v886
    %1028 = vmatpush.bf16.msra.mxu0 %v882
    %1029 = vmatpush.bf16.msra.mxu0 %v878
    %1030 = vmatpush.bf16.msra.mxu0 %v874
    %1031 = vmatpush.bf16.msra.mxu0 %v870
    %1032 = vmatpush.bf16.msra.mxu0 %v866
    %1033 = vmatpush.bf16.msra.mxu0 %v862
    %1034 = vmatmul.bf16.gmra.mxu0 %v562
    %v1035 = vpop.f32.mrf.mxu0
    %v1036 = vadd.f32 %v1022, %v1035
    %v1037 = vpop.f32.mrf.mxu0
    %v1038 = vadd.f32 %v1024, %v1037
    %1039 = vdwg.mxu0
    %1040 = vmatpush.bf16.msra.mxu0 %v859
    %1041 = vmatpush.bf16.msra.mxu0 %v855
    %1042 = vmatpush.bf16.msra.mxu0 %v851
    %1043 = vmatpush.bf16.msra.mxu0 %v847
    %1044 = vmatpush.bf16.msra.mxu0 %v843
    %1045 = vmatpush.bf16.msra.mxu0 %v839
    %1046 = vmatpush.bf16.msra.mxu0 %v835
    %1047 = vmatpush.bf16.msra.mxu0 %v831
    %1048 = vmatmul.bf16.gmra.mxu0 %v561
    %v1049 = vpop.f32.mrf.mxu0
    %v1050 = vadd.f32 %v631, %v1049
    %v1051 = vpop.f32.mrf.mxu0
    %v1052 = vadd.f32 %v631, %v1051
    %1053 = vdwg.mxu0
    %1054 = vmatpush.bf16.msra.mxu0 %v891
    %1055 = vmatpush.bf16.msra.mxu0 %v887
    %1056 = vmatpush.bf16.msra.mxu0 %v883
    %1057 = vmatpush.bf16.msra.mxu0 %v879
    %1058 = vmatpush.bf16.msra.mxu0 %v875
    %1059 = vmatpush.bf16.msra.mxu0 %v871
    %1060 = vmatpush.bf16.msra.mxu0 %v867
    %1061 = vmatpush.bf16.msra.mxu0 %v863
    %1062 = vmatmul.bf16.gmra.mxu0 %v562
    %v1063 = vpop.f32.mrf.mxu0
    %v1064 = vadd.f32 %v1050, %v1063
    %v1065 = vpop.f32.mrf.mxu0
    %v1066 = vadd.f32 %v1052, %v1065
    %1067 = vdwg.mxu0
    %v1068 = vpack.c.bf16 %v1008, %v980
    %v1069 = vpack.c.bf16 %v1064, %v1036
    %v1070 = vpack.c.bf16 %v1010, %v982
    %v1071 = vpack.c.bf16 %v1066, %v1038
    %1072 = vst [vmem:[#allocation2] sm:$0xff] %v1068
    %1073 = vst [vmem:[#allocation2 + $0x8] sm:$0xff] %v1069
    %1074 = vst [vmem:[#allocation2 + $0x10] sm:$0xff] %v1070
    %1075 = vst [vmem:[#allocation2 + $0x18] sm:$0xff] %v1071
    %v1076 = vld [vmem:[%s1] sm:$0xff]
    %v1077 = vld [vmem:[%s1 + $0x8] sm:$0xff]
    %v1078 = vld [vmem:[%s1 + $0x10] sm:$0xff]
    %v1079 = vld [vmem:[%s1 + $0x18] sm:$0xff]
    %v1080 = vunpack.c.l.bf16 %v1076
    %v1081 = vunpack.c.h.bf16 %v1076
    %v1082 = vunpack.c.l.bf16 %v1077
    %v1083 = vunpack.c.h.bf16 %v1077
    %v1084 = vunpack.c.l.bf16 %v1078
    %v1085 = vunpack.c.h.bf16 %v1078
    %v1086 = vunpack.c.l.bf16 %v1079
    %v1087 = vunpack.c.h.bf16 %v1079
    %v1088 = vadd.f32 %v980, %v1080
    %v1089 = vadd.f32 %v1008, %v1081
    %v1090 = vadd.f32 %v1036, %v1082
    %v1091 = vadd.f32 %v1064, %v1083
    %v1092 = vadd.f32 %v982, %v1084
    %v1093 = vadd.f32 %v1010, %v1085
    %v1094 = vadd.f32 %v1038, %v1086
    %v1095 = vadd.f32 %v1066, %v1087
    %v1096 = vpack.c.bf16 %v1092, %v1088
    %v1097 = vpack.c.bf16 %v1093, %v1089
    %v1098 = vpack.c.bf16 %v1094, %v1090
    %v1099 = vpack.c.bf16 %v1095, %v1091
    %v1100 = vld [vmem:[%s6] sm:$0xff]
    %v1101 = vld [vmem:[%s6 + $0x8] sm:$0xff]
    %v1102 = vld [vmem:[%s6 + $0x10] sm:$0xff]
    %v1103 = vld [vmem:[%s6 + $0x18] sm:$0xff]
    %v1104 = vld [vmem:[%s6 + $0x20] sm:$0xff]
    %v1105 = vld [vmem:[%s6 + $0x28] sm:$0xff]
    %v1106 = vld [vmem:[%s6 + $0x30] sm:$0xff]
    %v1107 = vld [vmem:[%s6 + $0x38] sm:$0xff]
    %v1108 = vld [vmem:[%s6 + $0x40] sm:$0xff]
    %v1109 = vld [vmem:[%s6 + $0x48] sm:$0xff]
    %v1110 = vld [vmem:[%s6 + $0x50] sm:$0xff]
    %v1111 = vld [vmem:[%s6 + $0x58] sm:$0xff]
    %v1112 = vld [vmem:[%s6 + $0x60] sm:$0xff]
    %v1113 = vld [vmem:[%s6 + $0x68] sm:$0xff]
    %v1114 = vld [vmem:[%s6 + $0x70] sm:$0xff]
    %v1115 = vld [vmem:[%s6 + $0x78] sm:$0xff]
    %v1116 = vld [vmem:[%s6 + $0x80] sm:$0xff]
    %v1117 = vld [vmem:[%s6 + $0x88] sm:$0xff]
    %v1118 = vld [vmem:[%s6 + $0x90] sm:$0xff]
    %v1119 = vld [vmem:[%s6 + $0x98] sm:$0xff]
    %v1120 = vld [vmem:[%s6 + $0xa0] sm:$0xff]
    %v1121 = vld [vmem:[%s6 + $0xa8] sm:$0xff]
    %v1122 = vld [vmem:[%s6 + $0xb0] sm:$0xff]
    %v1123 = vld [vmem:[%s6 + $0xb8] sm:$0xff]
    %v1124 = vld [vmem:[%s6 + $0xc0] sm:$0xff]
    %v1125 = vld [vmem:[%s6 + $0xc8] sm:$0xff]
    %v1126 = vld [vmem:[%s6 + $0xd0] sm:$0xff]
    %v1127 = vld [vmem:[%s6 + $0xd8] sm:$0xff]
    %v1128 = vld [vmem:[%s6 + $0xe0] sm:$0xff]
    %v1129 = vld [vmem:[%s6 + $0xe8] sm:$0xff]
    %v1130 = vld [vmem:[%s6 + $0xf0] sm:$0xff]
    %v1131 = vld [vmem:[%s6 + $0xf8] sm:$0xff]
    %v1132 = vld [vmem:[%s6 + $0x100] sm:$0xff]
    %v1133 = vld [vmem:[%s6 + $0x108] sm:$0xff]
    %v1134 = vld [vmem:[%s6 + $0x110] sm:$0xff]
    %v1135 = vld [vmem:[%s6 + $0x118] sm:$0xff]
    %v1136 = vld [vmem:[%s6 + $0x120] sm:$0xff]
    %v1137 = vld [vmem:[%s6 + $0x128] sm:$0xff]
    %v1138 = vld [vmem:[%s6 + $0x130] sm:$0xff]
    %v1139 = vld [vmem:[%s6 + $0x138] sm:$0xff]
    %v1140 = vld [vmem:[%s6 + $0x140] sm:$0xff]
    %v1141 = vld [vmem:[%s6 + $0x148] sm:$0xff]
    %v1142 = vld [vmem:[%s6 + $0x150] sm:$0xff]
    %v1143 = vld [vmem:[%s6 + $0x158] sm:$0xff]
    %v1144 = vld [vmem:[%s6 + $0x160] sm:$0xff]
    %v1145 = vld [vmem:[%s6 + $0x168] sm:$0xff]
    %v1146 = vld [vmem:[%s6 + $0x170] sm:$0xff]
    %v1147 = vld [vmem:[%s6 + $0x178] sm:$0xff]
    %v1148 = vld [vmem:[%s6 + $0x180] sm:$0xff]
    %v1149 = vld [vmem:[%s6 + $0x188] sm:$0xff]
    %v1150 = vld [vmem:[%s6 + $0x190] sm:$0xff]
    %v1151 = vld [vmem:[%s6 + $0x198] sm:$0xff]
    %v1152 = vld [vmem:[%s6 + $0x1a0] sm:$0xff]
    %v1153 = vld [vmem:[%s6 + $0x1a8] sm:$0xff]
    %v1154 = vld [vmem:[%s6 + $0x1b0] sm:$0xff]
    %v1155 = vld [vmem:[%s6 + $0x1b8] sm:$0xff]
    %v1156 = vld [vmem:[%s6 + $0x1c0] sm:$0xff]
    %v1157 = vld [vmem:[%s6 + $0x1c8] sm:$0xff]
    %v1158 = vld [vmem:[%s6 + $0x1d0] sm:$0xff]
    %v1159 = vld [vmem:[%s6 + $0x1d8] sm:$0xff]
    %v1160 = vld [vmem:[%s6 + $0x1e0] sm:$0xff]
    %v1161 = vld [vmem:[%s6 + $0x1e8] sm:$0xff]
    %v1162 = vld [vmem:[%s6 + $0x1f0] sm:$0xff]
    %v1163 = vld [vmem:[%s6 + $0x1f8] sm:$0xff]
    %v1164 = vld [vmem:[%s6 + $0x200] sm:$0xff]
    %v1165 = vld [vmem:[%s6 + $0x208] sm:$0xff]
    %v1166 = vld [vmem:[%s6 + $0x210] sm:$0xff]
    %v1167 = vld [vmem:[%s6 + $0x218] sm:$0xff]
    %v1168 = vld [vmem:[%s6 + $0x220] sm:$0xff]
    %v1169 = vld [vmem:[%s6 + $0x228] sm:$0xff]
    %v1170 = vld [vmem:[%s6 + $0x230] sm:$0xff]
    %v1171 = vld [vmem:[%s6 + $0x238] sm:$0xff]
    %v1172 = vld [vmem:[%s6 + $0x240] sm:$0xff]
    %v1173 = vld [vmem:[%s6 + $0x248] sm:$0xff]
    %v1174 = vld [vmem:[%s6 + $0x250] sm:$0xff]
    %v1175 = vld [vmem:[%s6 + $0x258] sm:$0xff]
    %v1176 = vld [vmem:[%s6 + $0x260] sm:$0xff]
    %v1177 = vld [vmem:[%s6 + $0x268] sm:$0xff]
    %v1178 = vld [vmem:[%s6 + $0x270] sm:$0xff]
    %v1179 = vld [vmem:[%s6 + $0x278] sm:$0xff]
    %v1180 = vld [vmem:[%s6 + $0x280] sm:$0xff]
    %v1181 = vld [vmem:[%s6 + $0x288] sm:$0xff]
    %v1182 = vld [vmem:[%s6 + $0x290] sm:$0xff]
    %v1183 = vld [vmem:[%s6 + $0x298] sm:$0xff]
    %v1184 = vld [vmem:[%s6 + $0x2a0] sm:$0xff]
    %v1185 = vld [vmem:[%s6 + $0x2a8] sm:$0xff]
    %v1186 = vld [vmem:[%s6 + $0x2b0] sm:$0xff]
    %v1187 = vld [vmem:[%s6 + $0x2b8] sm:$0xff]
    %v1188 = vld [vmem:[%s6 + $0x2c0] sm:$0xff]
    %v1189 = vld [vmem:[%s6 + $0x2c8] sm:$0xff]
    %v1190 = vld [vmem:[%s6 + $0x2d0] sm:$0xff]
    %v1191 = vld [vmem:[%s6 + $0x2d8] sm:$0xff]
    %v1192 = vld [vmem:[%s6 + $0x2e0] sm:$0xff]
    %v1193 = vld [vmem:[%s6 + $0x2e8] sm:$0xff]
    %v1194 = vld [vmem:[%s6 + $0x2f0] sm:$0xff]
    %v1195 = vld [vmem:[%s6 + $0x2f8] sm:$0xff]
    %v1196 = vld [vmem:[%s6 + $0x300] sm:$0xff]
    %v1197 = vld [vmem:[%s6 + $0x308] sm:$0xff]
    %v1198 = vld [vmem:[%s6 + $0x310] sm:$0xff]
    %v1199 = vld [vmem:[%s6 + $0x318] sm:$0xff]
    %v1200 = vld [vmem:[%s6 + $0x320] sm:$0xff]
    %v1201 = vld [vmem:[%s6 + $0x328] sm:$0xff]
    %v1202 = vld [vmem:[%s6 + $0x330] sm:$0xff]
    %v1203 = vld [vmem:[%s6 + $0x338] sm:$0xff]
    %v1204 = vld [vmem:[%s6 + $0x340] sm:$0xff]
    %v1205 = vld [vmem:[%s6 + $0x348] sm:$0xff]
    %v1206 = vld [vmem:[%s6 + $0x350] sm:$0xff]
    %v1207 = vld [vmem:[%s6 + $0x358] sm:$0xff]
    %v1208 = vld [vmem:[%s6 + $0x360] sm:$0xff]
    %v1209 = vld [vmem:[%s6 + $0x368] sm:$0xff]
    %v1210 = vld [vmem:[%s6 + $0x370] sm:$0xff]
    %v1211 = vld [vmem:[%s6 + $0x378] sm:$0xff]
    %v1212 = vld [vmem:[%s6 + $0x380] sm:$0xff]
    %v1213 = vld [vmem:[%s6 + $0x388] sm:$0xff]
    %v1214 = vld [vmem:[%s6 + $0x390] sm:$0xff]
    %v1215 = vld [vmem:[%s6 + $0x398] sm:$0xff]
    %v1216 = vld [vmem:[%s6 + $0x3a0] sm:$0xff]
    %v1217 = vld [vmem:[%s6 + $0x3a8] sm:$0xff]
    %v1218 = vld [vmem:[%s6 + $0x3b0] sm:$0xff]
    %v1219 = vld [vmem:[%s6 + $0x3b8] sm:$0xff]
    %v1220 = vld [vmem:[%s6 + $0x3c0] sm:$0xff]
    %v1221 = vld [vmem:[%s6 + $0x3c8] sm:$0xff]
    %v1222 = vld [vmem:[%s6 + $0x3d0] sm:$0xff]
    %v1223 = vld [vmem:[%s6 + $0x3d8] sm:$0xff]
    %v1224 = vld [vmem:[%s6 + $0x3e0] sm:$0xff]
    %v1225 = vld [vmem:[%s6 + $0x3e8] sm:$0xff]
    %v1226 = vld [vmem:[%s6 + $0x3f0] sm:$0xff]
    %v1227 = vld [vmem:[%s6 + $0x3f8] sm:$0xff]
    %v1356 = vunpack.c.l.b16 %v1100
    %v1357 = vunpack.c.h.b16 %v1100
    %v1358 = vunpack.c.l.b16 %v1101
    %v1359 = vunpack.c.h.b16 %v1101
    %v1360 = vunpack.c.l.b16 %v1102
    %v1361 = vunpack.c.h.b16 %v1102
    %v1362 = vunpack.c.l.b16 %v1103
    %v1363 = vunpack.c.h.b16 %v1103
    %v1364 = vunpack.c.l.b16 %v1104
    %v1365 = vunpack.c.h.b16 %v1104
    %v1366 = vunpack.c.l.b16 %v1105
    %v1367 = vunpack.c.h.b16 %v1105
    %v1368 = vunpack.c.l.b16 %v1106
    %v1369 = vunpack.c.h.b16 %v1106
    %v1370 = vunpack.c.l.b16 %v1107
    %v1371 = vunpack.c.h.b16 %v1107
    %v1372 = vunpack.c.l.b16 %v1108
    %v1373 = vunpack.c.h.b16 %v1108
    %v1374 = vunpack.c.l.b16 %v1109
    %v1375 = vunpack.c.h.b16 %v1109
    %v1376 = vunpack.c.l.b16 %v1110
    %v1377 = vunpack.c.h.b16 %v1110
    %v1378 = vunpack.c.l.b16 %v1111
    %v1379 = vunpack.c.h.b16 %v1111
    %v1380 = vunpack.c.l.b16 %v1112
    %v1381 = vunpack.c.h.b16 %v1112
    %v1382 = vunpack.c.l.b16 %v1113
    %v1383 = vunpack.c.h.b16 %v1113
    %v1384 = vunpack.c.l.b16 %v1114
    %v1385 = vunpack.c.h.b16 %v1114
    %v1386 = vunpack.c.l.b16 %v1115
    %v1387 = vunpack.c.h.b16 %v1115
    %v1388 = vunpack.c.l.b16 %v1116
    %v1389 = vunpack.c.h.b16 %v1116
    %v1390 = vunpack.c.l.b16 %v1117
    %v1391 = vunpack.c.h.b16 %v1117
    %v1392 = vunpack.c.l.b16 %v1118
    %v1393 = vunpack.c.h.b16 %v1118
    %v1394 = vunpack.c.l.b16 %v1119
    %v1395 = vunpack.c.h.b16 %v1119
    %v1396 = vunpack.c.l.b16 %v1120
    %v1397 = vunpack.c.h.b16 %v1120
    %v1398 = vunpack.c.l.b16 %v1121
    %v1399 = vunpack.c.h.b16 %v1121
    %v1400 = vunpack.c.l.b16 %v1122
    %v1401 = vunpack.c.h.b16 %v1122
    %v1402 = vunpack.c.l.b16 %v1123
    %v1403 = vunpack.c.h.b16 %v1123
    %v1404 = vunpack.c.l.b16 %v1124
    %v1405 = vunpack.c.h.b16 %v1124
    %v1406 = vunpack.c.l.b16 %v1125
    %v1407 = vunpack.c.h.b16 %v1125
    %v1408 = vunpack.c.l.b16 %v1126
    %v1409 = vunpack.c.h.b16 %v1126
    %v1410 = vunpack.c.l.b16 %v1127
    %v1411 = vunpack.c.h.b16 %v1127
    %v1412 = vunpack.c.l.b16 %v1128
    %v1413 = vunpack.c.h.b16 %v1128
    %v1414 = vunpack.c.l.b16 %v1129
    %v1415 = vunpack.c.h.b16 %v1129
    %v1416 = vunpack.c.l.b16 %v1130
    %v1417 = vunpack.c.h.b16 %v1130
    %v1418 = vunpack.c.l.b16 %v1131
    %v1419 = vunpack.c.h.b16 %v1131
    %v1420 = vunpack.c.l.b16 %v1132
    %v1421 = vunpack.c.h.b16 %v1132
    %v1422 = vunpack.c.l.b16 %v1133
    %v1423 = vunpack.c.h.b16 %v1133
    %v1424 = vunpack.c.l.b16 %v1134
    %v1425 = vunpack.c.h.b16 %v1134
    %v1426 = vunpack.c.l.b16 %v1135
    %v1427 = vunpack.c.h.b16 %v1135
    %v1428 = vunpack.c.l.b16 %v1136
    %v1429 = vunpack.c.h.b16 %v1136
    %v1430 = vunpack.c.l.b16 %v1137
    %v1431 = vunpack.c.h.b16 %v1137
    %v1432 = vunpack.c.l.b16 %v1138
    %v1433 = vunpack.c.h.b16 %v1138
    %v1434 = vunpack.c.l.b16 %v1139
    %v1435 = vunpack.c.h.b16 %v1139
    %v1436 = vunpack.c.l.b16 %v1140
    %v1437 = vunpack.c.h.b16 %v1140
    %v1438 = vunpack.c.l.b16 %v1141
    %v1439 = vunpack.c.h.b16 %v1141
    %v1440 = vunpack.c.l.b16 %v1142
    %v1441 = vunpack.c.h.b16 %v1142
    %v1442 = vunpack.c.l.b16 %v1143
    %v1443 = vunpack.c.h.b16 %v1143
    %v1444 = vunpack.c.l.b16 %v1144
    %v1445 = vunpack.c.h.b16 %v1144
    %v1446 = vunpack.c.l.b16 %v1145
    %v1447 = vunpack.c.h.b16 %v1145
    %v1448 = vunpack.c.l.b16 %v1146
    %v1449 = vunpack.c.h.b16 %v1146
    %v1450 = vunpack.c.l.b16 %v1147
    %v1451 = vunpack.c.h.b16 %v1147
    %v1452 = vunpack.c.l.b16 %v1148
    %v1453 = vunpack.c.h.b16 %v1148
    %v1454 = vunpack.c.l.b16 %v1149
    %v1455 = vunpack.c.h.b16 %v1149
    %v1456 = vunpack.c.l.b16 %v1150
    %v1457 = vunpack.c.h.b16 %v1150
    %v1458 = vunpack.c.l.b16 %v1151
    %v1459 = vunpack.c.h.b16 %v1151
    %v1460 = vunpack.c.l.b16 %v1152
    %v1461 = vunpack.c.h.b16 %v1152
    %v1462 = vunpack.c.l.b16 %v1153
    %v1463 = vunpack.c.h.b16 %v1153
    %v1464 = vunpack.c.l.b16 %v1154
    %v1465 = vunpack.c.h.b16 %v1154
    %v1466 = vunpack.c.l.b16 %v1155
    %v1467 = vunpack.c.h.b16 %v1155
    %v1468 = vunpack.c.l.b16 %v1156
    %v1469 = vunpack.c.h.b16 %v1156
    %v1470 = vunpack.c.l.b16 %v1157
    %v1471 = vunpack.c.h.b16 %v1157
    %v1472 = vunpack.c.l.b16 %v1158
    %v1473 = vunpack.c.h.b16 %v1158
    %v1474 = vunpack.c.l.b16 %v1159
    %v1475 = vunpack.c.h.b16 %v1159
    %v1476 = vunpack.c.l.b16 %v1160
    %v1477 = vunpack.c.h.b16 %v1160
    %v1478 = vunpack.c.l.b16 %v1161
    %v1479 = vunpack.c.h.b16 %v1161
    %v1480 = vunpack.c.l.b16 %v1162
    %v1481 = vunpack.c.h.b16 %v1162
    %v1482 = vunpack.c.l.b16 %v1163
    %v1483 = vunpack.c.h.b16 %v1163
    %v1484 = vunpack.c.l.b16 %v1164
    %v1485 = vunpack.c.h.b16 %v1164
    %v1486 = vunpack.c.l.b16 %v1165
    %v1487 = vunpack.c.h.b16 %v1165
    %v1488 = vunpack.c.l.b16 %v1166
    %v1489 = vunpack.c.h.b16 %v1166
    %v1490 = vunpack.c.l.b16 %v1167
    %v1491 = vunpack.c.h.b16 %v1167
    %v1492 = vunpack.c.l.b16 %v1168
    %v1493 = vunpack.c.h.b16 %v1168
    %v1494 = vunpack.c.l.b16 %v1169
    %v1495 = vunpack.c.h.b16 %v1169
    %v1496 = vunpack.c.l.b16 %v1170
    %v1497 = vunpack.c.h.b16 %v1170
    %v1498 = vunpack.c.l.b16 %v1171
    %v1499 = vunpack.c.h.b16 %v1171
    %v1500 = vunpack.c.l.b16 %v1172
    %v1501 = vunpack.c.h.b16 %v1172
    %v1502 = vunpack.c.l.b16 %v1173
    %v1503 = vunpack.c.h.b16 %v1173
    %v1504 = vunpack.c.l.b16 %v1174
    %v1505 = vunpack.c.h.b16 %v1174
    %v1506 = vunpack.c.l.b16 %v1175
    %v1507 = vunpack.c.h.b16 %v1175
    %v1508 = vunpack.c.l.b16 %v1176
    %v1509 = vunpack.c.h.b16 %v1176
    %v1510 = vunpack.c.l.b16 %v1177
    %v1511 = vunpack.c.h.b16 %v1177
    %v1512 = vunpack.c.l.b16 %v1178
    %v1513 = vunpack.c.h.b16 %v1178
    %v1514 = vunpack.c.l.b16 %v1179
    %v1515 = vunpack.c.h.b16 %v1179
    %v1516 = vunpack.c.l.b16 %v1180
    %v1517 = vunpack.c.h.b16 %v1180
    %v1518 = vunpack.c.l.b16 %v1181
    %v1519 = vunpack.c.h.b16 %v1181
    %v1520 = vunpack.c.l.b16 %v1182
    %v1521 = vunpack.c.h.b16 %v1182
    %v1522 = vunpack.c.l.b16 %v1183
    %v1523 = vunpack.c.h.b16 %v1183
    %v1524 = vunpack.c.l.b16 %v1184
    %v1525 = vunpack.c.h.b16 %v1184
    %v1526 = vunpack.c.l.b16 %v1185
    %v1527 = vunpack.c.h.b16 %v1185
    %v1528 = vunpack.c.l.b16 %v1186
    %v1529 = vunpack.c.h.b16 %v1186
    %v1530 = vunpack.c.l.b16 %v1187
    %v1531 = vunpack.c.h.b16 %v1187
    %v1532 = vunpack.c.l.b16 %v1188
    %v1533 = vunpack.c.h.b16 %v1188
    %v1534 = vunpack.c.l.b16 %v1189
    %v1535 = vunpack.c.h.b16 %v1189
    %v1536 = vunpack.c.l.b16 %v1190
    %v1537 = vunpack.c.h.b16 %v1190
    %v1538 = vunpack.c.l.b16 %v1191
    %v1539 = vunpack.c.h.b16 %v1191
    %v1540 = vunpack.c.l.b16 %v1192
    %v1541 = vunpack.c.h.b16 %v1192
    %v1542 = vunpack.c.l.b16 %v1193
    %v1543 = vunpack.c.h.b16 %v1193
    %v1544 = vunpack.c.l.b16 %v1194
    %v1545 = vunpack.c.h.b16 %v1194
    %v1546 = vunpack.c.l.b16 %v1195
    %v1547 = vunpack.c.h.b16 %v1195
    %v1548 = vunpack.c.l.b16 %v1196
    %v1549 = vunpack.c.h.b16 %v1196
    %v1550 = vunpack.c.l.b16 %v1197
    %v1551 = vunpack.c.h.b16 %v1197
    %v1552 = vunpack.c.l.b16 %v1198
    %v1553 = vunpack.c.h.b16 %v1198
    %v1554 = vunpack.c.l.b16 %v1199
    %v1555 = vunpack.c.h.b16 %v1199
    %v1556 = vunpack.c.l.b16 %v1200
    %v1557 = vunpack.c.h.b16 %v1200
    %v1558 = vunpack.c.l.b16 %v1201
    %v1559 = vunpack.c.h.b16 %v1201
    %v1560 = vunpack.c.l.b16 %v1202
    %v1561 = vunpack.c.h.b16 %v1202
    %v1562 = vunpack.c.l.b16 %v1203
    %v1563 = vunpack.c.h.b16 %v1203
    %v1564 = vunpack.c.l.b16 %v1204
    %v1565 = vunpack.c.h.b16 %v1204
    %v1566 = vunpack.c.l.b16 %v1205
    %v1567 = vunpack.c.h.b16 %v1205
    %v1568 = vunpack.c.l.b16 %v1206
    %v1569 = vunpack.c.h.b16 %v1206
    %v1570 = vunpack.c.l.b16 %v1207
    %v1571 = vunpack.c.h.b16 %v1207
    %v1572 = vunpack.c.l.b16 %v1208
    %v1573 = vunpack.c.h.b16 %v1208
    %v1574 = vunpack.c.l.b16 %v1209
    %v1575 = vunpack.c.h.b16 %v1209
    %v1576 = vunpack.c.l.b16 %v1210
    %v1577 = vunpack.c.h.b16 %v1210
    %v1578 = vunpack.c.l.b16 %v1211
    %v1579 = vunpack.c.h.b16 %v1211
    %v1580 = vunpack.c.l.b16 %v1212
    %v1581 = vunpack.c.h.b16 %v1212
    %v1582 = vunpack.c.l.b16 %v1213
    %v1583 = vunpack.c.h.b16 %v1213
    %v1584 = vunpack.c.l.b16 %v1214
    %v1585 = vunpack.c.h.b16 %v1214
    %v1586 = vunpack.c.l.b16 %v1215
    %v1587 = vunpack.c.h.b16 %v1215
    %v1588 = vunpack.c.l.b16 %v1216
    %v1589 = vunpack.c.h.b16 %v1216
    %v1590 = vunpack.c.l.b16 %v1217
    %v1591 = vunpack.c.h.b16 %v1217
    %v1592 = vunpack.c.l.b16 %v1218
    %v1593 = vunpack.c.h.b16 %v1218
    %v1594 = vunpack.c.l.b16 %v1219
    %v1595 = vunpack.c.h.b16 %v1219
    %v1596 = vunpack.c.l.b16 %v1220
    %v1597 = vunpack.c.h.b16 %v1220
    %v1598 = vunpack.c.l.b16 %v1221
    %v1599 = vunpack.c.h.b16 %v1221
    %v1600 = vunpack.c.l.b16 %v1222
    %v1601 = vunpack.c.h.b16 %v1222
    %v1602 = vunpack.c.l.b16 %v1223
    %v1603 = vunpack.c.h.b16 %v1223
    %v1604 = vunpack.c.l.b16 %v1224
    %v1605 = vunpack.c.h.b16 %v1224
    %v1606 = vunpack.c.l.b16 %v1225
    %v1607 = vunpack.c.h.b16 %v1225
    %v1608 = vunpack.c.l.b16 %v1226
    %v1609 = vunpack.c.h.b16 %v1226
    %v1610 = vunpack.c.l.b16 %v1227
    %v1611 = vunpack.c.h.b16 %v1227
    %v1612 = vpack.c.b16 %v1360, %v1356
    %v1613 = vpack.c.b16 %v1361, %v1357
    %v1614 = vpack.c.b16 %v1362, %v1358
    %v1615 = vpack.c.b16 %v1363, %v1359
    %v1616 = vpack.c.b16 %v1368, %v1364
    %v1617 = vpack.c.b16 %v1369, %v1365
    %v1618 = vpack.c.b16 %v1370, %v1366
    %v1619 = vpack.c.b16 %v1371, %v1367
    %v1620 = vpack.c.b16 %v1376, %v1372
    %v1621 = vpack.c.b16 %v1377, %v1373
    %v1622 = vpack.c.b16 %v1378, %v1374
    %v1623 = vpack.c.b16 %v1379, %v1375
    %v1624 = vpack.c.b16 %v1384, %v1380
    %v1625 = vpack.c.b16 %v1385, %v1381
    %v1626 = vpack.c.b16 %v1386, %v1382
    %v1627 = vpack.c.b16 %v1387, %v1383
    %v1628 = vpack.c.b16 %v1392, %v1388
    %v1629 = vpack.c.b16 %v1393, %v1389
    %v1630 = vpack.c.b16 %v1394, %v1390
    %v1631 = vpack.c.b16 %v1395, %v1391
    %v1632 = vpack.c.b16 %v1400, %v1396
    %v1633 = vpack.c.b16 %v1401, %v1397
    %v1634 = vpack.c.b16 %v1402, %v1398
    %v1635 = vpack.c.b16 %v1403, %v1399
    %v1636 = vpack.c.b16 %v1408, %v1404
    %v1637 = vpack.c.b16 %v1409, %v1405
    %v1638 = vpack.c.b16 %v1410, %v1406
    %v1639 = vpack.c.b16 %v1411, %v1407
    %v1640 = vpack.c.b16 %v1416, %v1412
    %v1641 = vpack.c.b16 %v1417, %v1413
    %v1642 = vpack.c.b16 %v1418, %v1414
    %v1643 = vpack.c.b16 %v1419, %v1415
    %v1644 = vpack.c.b16 %v1424, %v1420
    %v1645 = vpack.c.b16 %v1425, %v1421
    %v1646 = vpack.c.b16 %v1426, %v1422
    %v1647 = vpack.c.b16 %v1427, %v1423
    %v1648 = vpack.c.b16 %v1432, %v1428
    %v1649 = vpack.c.b16 %v1433, %v1429
    %v1650 = vpack.c.b16 %v1434, %v1430
    %v1651 = vpack.c.b16 %v1435, %v1431
    %v1652 = vpack.c.b16 %v1440, %v1436
    %v1653 = vpack.c.b16 %v1441, %v1437
    %v1654 = vpack.c.b16 %v1442, %v1438
    %v1655 = vpack.c.b16 %v1443, %v1439
    %v1656 = vpack.c.b16 %v1448, %v1444
    %v1657 = vpack.c.b16 %v1449, %v1445
    %v1658 = vpack.c.b16 %v1450, %v1446
    %v1659 = vpack.c.b16 %v1451, %v1447
    %v1660 = vpack.c.b16 %v1456, %v1452
    %v1661 = vpack.c.b16 %v1457, %v1453
    %v1662 = vpack.c.b16 %v1458, %v1454
    %v1663 = vpack.c.b16 %v1459, %v1455
    %v1664 = vpack.c.b16 %v1464, %v1460
    %v1665 = vpack.c.b16 %v1465, %v1461
    %v1666 = vpack.c.b16 %v1466, %v1462
    %v1667 = vpack.c.b16 %v1467, %v1463
    %v1668 = vpack.c.b16 %v1472, %v1468
    %v1669 = vpack.c.b16 %v1473, %v1469
    %v1670 = vpack.c.b16 %v1474, %v1470
    %v1671 = vpack.c.b16 %v1475, %v1471
    %v1672 = vpack.c.b16 %v1480, %v1476
    %v1673 = vpack.c.b16 %v1481, %v1477
    %v1674 = vpack.c.b16 %v1482, %v1478
    %v1675 = vpack.c.b16 %v1483, %v1479
    %v1676 = vpack.c.b16 %v1488, %v1484
    %v1677 = vpack.c.b16 %v1489, %v1485
    %v1678 = vpack.c.b16 %v1490, %v1486
    %v1679 = vpack.c.b16 %v1491, %v1487
    %v1680 = vpack.c.b16 %v1496, %v1492
    %v1681 = vpack.c.b16 %v1497, %v1493
    %v1682 = vpack.c.b16 %v1498, %v1494
    %v1683 = vpack.c.b16 %v1499, %v1495
    %v1684 = vpack.c.b16 %v1504, %v1500
    %v1685 = vpack.c.b16 %v1505, %v1501
    %v1686 = vpack.c.b16 %v1506, %v1502
    %v1687 = vpack.c.b16 %v1507, %v1503
    %v1688 = vpack.c.b16 %v1512, %v1508
    %v1689 = vpack.c.b16 %v1513, %v1509
    %v1690 = vpack.c.b16 %v1514, %v1510
    %v1691 = vpack.c.b16 %v1515, %v1511
    %v1692 = vpack.c.b16 %v1520, %v1516
    %v1693 = vpack.c.b16 %v1521, %v1517
    %v1694 = vpack.c.b16 %v1522, %v1518
    %v1695 = vpack.c.b16 %v1523, %v1519
    %v1696 = vpack.c.b16 %v1528, %v1524
    %v1697 = vpack.c.b16 %v1529, %v1525
    %v1698 = vpack.c.b16 %v1530, %v1526
    %v1699 = vpack.c.b16 %v1531, %v1527
    %v1700 = vpack.c.b16 %v1536, %v1532
    %v1701 = vpack.c.b16 %v1537, %v1533
    %v1702 = vpack.c.b16 %v1538, %v1534
    %v1703 = vpack.c.b16 %v1539, %v1535
    %v1704 = vpack.c.b16 %v1544, %v1540
    %v1705 = vpack.c.b16 %v1545, %v1541
    %v1706 = vpack.c.b16 %v1546, %v1542
    %v1707 = vpack.c.b16 %v1547, %v1543
    %v1708 = vpack.c.b16 %v1552, %v1548
    %v1709 = vpack.c.b16 %v1553, %v1549
    %v1710 = vpack.c.b16 %v1554, %v1550
    %v1711 = vpack.c.b16 %v1555, %v1551
    %v1712 = vpack.c.b16 %v1560, %v1556
    %v1713 = vpack.c.b16 %v1561, %v1557
    %v1714 = vpack.c.b16 %v1562, %v1558
    %v1715 = vpack.c.b16 %v1563, %v1559
    %v1716 = vpack.c.b16 %v1568, %v1564
    %v1717 = vpack.c.b16 %v1569, %v1565
    %v1718 = vpack.c.b16 %v1570, %v1566
    %v1719 = vpack.c.b16 %v1571, %v1567
    %v1720 = vpack.c.b16 %v1576, %v1572
    %v1721 = vpack.c.b16 %v1577, %v1573
    %v1722 = vpack.c.b16 %v1578, %v1574
    %v1723 = vpack.c.b16 %v1579, %v1575
    %v1724 = vpack.c.b16 %v1584, %v1580
    %v1725 = vpack.c.b16 %v1585, %v1581
    %v1726 = vpack.c.b16 %v1586, %v1582
    %v1727 = vpack.c.b16 %v1587, %v1583
    %v1728 = vpack.c.b16 %v1592, %v1588
    %v1729 = vpack.c.b16 %v1593, %v1589
    %v1730 = vpack.c.b16 %v1594, %v1590
    %v1731 = vpack.c.b16 %v1595, %v1591
    %v1732 = vpack.c.b16 %v1600, %v1596
    %v1733 = vpack.c.b16 %v1601, %v1597
    %v1734 = vpack.c.b16 %v1602, %v1598
    %v1735 = vpack.c.b16 %v1603, %v1599
    %v1736 = vpack.c.b16 %v1608, %v1604
    %v1737 = vpack.c.b16 %v1609, %v1605
    %v1738 = vpack.c.b16 %v1610, %v1606
    %v1739 = vpack.c.b16 %v1611, %v1607
    %1868 = vmatpush.bf16.msra.mxu0 %v1640
    %1869 = vmatpush.bf16.msra.mxu0 %v1636
    %1870 = vmatpush.bf16.msra.mxu0 %v1632
    %1871 = vmatpush.bf16.msra.mxu0 %v1628
    %1872 = vmatpush.bf16.msra.mxu0 %v1624
    %1873 = vmatpush.bf16.msra.mxu0 %v1620
    %1874 = vmatpush.bf16.msra.mxu0 %v1616
    %1875 = vmatpush.bf16.msra.mxu0 %v1612
    %1876 = vmatmul.bf16.gmra.mxu0 %v1096
    %v1877 = vpop.f32.mrf.mxu0
    %v1878 = vadd.f32 0.0, %v1877
    %v1879 = vpop.f32.mrf.mxu0
    %v1880 = vadd.f32 0.0, %v1879
    %1881 = vdwg.mxu0
    %1882 = vmatpush.bf16.msra.mxu0 %v1672
    %1883 = vmatpush.bf16.msra.mxu0 %v1668
    %1884 = vmatpush.bf16.msra.mxu0 %v1664
    %1885 = vmatpush.bf16.msra.mxu0 %v1660
    %1886 = vmatpush.bf16.msra.mxu0 %v1656
    %1887 = vmatpush.bf16.msra.mxu0 %v1652
    %1888 = vmatpush.bf16.msra.mxu0 %v1648
    %1889 = vmatpush.bf16.msra.mxu0 %v1644
    %1890 = vmatmul.bf16.gmra.mxu0 %v1097
    %v1891 = vpop.f32.mrf.mxu0
    %v1892 = vadd.f32 %v1878, %v1891
    %v1893 = vpop.f32.mrf.mxu0
    %v1894 = vadd.f32 %v1880, %v1893
    %1895 = vdwg.mxu0
    %1896 = vmatpush.bf16.msra.mxu0 %v1704
    %1897 = vmatpush.bf16.msra.mxu0 %v1700
    %1898 = vmatpush.bf16.msra.mxu0 %v1696
    %1899 = vmatpush.bf16.msra.mxu0 %v1692
    %1900 = vmatpush.bf16.msra.mxu0 %v1688
    %1901 = vmatpush.bf16.msra.mxu0 %v1684
    %1902 = vmatpush.bf16.msra.mxu0 %v1680
    %1903 = vmatpush.bf16.msra.mxu0 %v1676
    %1904 = vmatmul.bf16.gmra.mxu0 %v1098
    %v1905 = vpop.f32.mrf.mxu0
    %v1906 = vadd.f32 %v1892, %v1905
    %v1907 = vpop.f32.mrf.mxu0
    %v1908 = vadd.f32 %v1894, %v1907
    %1909 = vdwg.mxu0
    %1910 = vmatpush.bf16.msra.mxu0 %v1736
    %1911 = vmatpush.bf16.msra.mxu0 %v1732
    %1912 = vmatpush.bf16.msra.mxu0 %v1728
    %1913 = vmatpush.bf16.msra.mxu0 %v1724
    %1914 = vmatpush.bf16.msra.mxu0 %v1720
    %1915 = vmatpush.bf16.msra.mxu0 %v1716
    %1916 = vmatpush.bf16.msra.mxu0 %v1712
    %1917 = vmatpush.bf16.msra.mxu0 %v1708
    %1918 = vmatmul.bf16.gmra.mxu0 %v1099
    %v1919 = vpop.f32.mrf.mxu0
    %v1920 = vadd.f32 %v1906, %v1919
    %v1921 = vpop.f32.mrf.mxu0
    %v1922 = vadd.f32 %v1908, %v1921
    %1923 = vdwg.mxu0
    %1924 = vmatpush.bf16.msra.mxu0 %v1641
    %1925 = vmatpush.bf16.msra.mxu0 %v1637
    %1926 = vmatpush.bf16.msra.mxu0 %v1633
    %1927 = vmatpush.bf16.msra.mxu0 %v1629
    %1928 = vmatpush.bf16.msra.mxu0 %v1625
    %1929 = vmatpush.bf16.msra.mxu0 %v1621
    %1930 = vmatpush.bf16.msra.mxu0 %v1617
    %1931 = vmatpush.bf16.msra.mxu0 %v1613
    %1932 = vmatmul.bf16.gmra.mxu0 %v1096
    %v1933 = vpop.f32.mrf.mxu0
    %v1934 = vadd.f32 0.0, %v1933
    %v1935 = vpop.f32.mrf.mxu0
    %v1936 = vadd.f32 0.0, %v1935
    %1937 = vdwg.mxu0
    %1938 = vmatpush.bf16.msra.mxu0 %v1673
    %1939 = vmatpush.bf16.msra.mxu0 %v1669
    %1940 = vmatpush.bf16.msra.mxu0 %v1665
    %1941 = vmatpush.bf16.msra.mxu0 %v1661
    %1942 = vmatpush.bf16.msra.mxu0 %v1657
    %1943 = vmatpush.bf16.msra.mxu0 %v1653
    %1944 = vmatpush.bf16.msra.mxu0 %v1649
    %1945 = vmatpush.bf16.msra.mxu0 %v1645
    %1946 = vmatmul.bf16.gmra.mxu0 %v1097
    %v1947 = vpop.f32.mrf.mxu0
    %v1948 = vadd.f32 %v1934, %v1947
    %v1949 = vpop.f32.mrf.mxu0
    %v1950 = vadd.f32 %v1936, %v1949
    %1951 = vdwg.mxu0
    %1952 = vmatpush.bf16.msra.mxu0 %v1705
    %1953 = vmatpush.bf16.msra.mxu0 %v1701
    %1954 = vmatpush.bf16.msra.mxu0 %v1697
    %1955 = vmatpush.bf16.msra.mxu0 %v1693
    %1956 = vmatpush.bf16.msra.mxu0 %v1689
    %1957 = vmatpush.bf16.msra.mxu0 %v1685
    %1958 = vmatpush.bf16.msra.mxu0 %v1681
    %1959 = vmatpush.bf16.msra.mxu0 %v1677
    %1960 = vmatmul.bf16.gmra.mxu0 %v1098
    %v1961 = vpop.f32.mrf.mxu0
    %v1962 = vadd.f32 %v1948, %v1961
    %v1963 = vpop.f32.mrf.mxu0
    %v1964 = vadd.f32 %v1950, %v1963
    %1965 = vdwg.mxu0
    %1966 = vmatpush.bf16.msra.mxu0 %v1737
    %1967 = vmatpush.bf16.msra.mxu0 %v1733
    %1968 = vmatpush.bf16.msra.mxu0 %v1729
    %1969 = vmatpush.bf16.msra.mxu0 %v1725
    %1970 = vmatpush.bf16.msra.mxu0 %v1721
    %1971 = vmatpush.bf16.msra.mxu0 %v1717
    %1972 = vmatpush.bf16.msra.mxu0 %v1713
    %1973 = vmatpush.bf16.msra.mxu0 %v1709
    %1974 = vmatmul.bf16.gmra.mxu0 %v1099
    %v1975 = vpop.f32.mrf.mxu0
    %v1976 = vadd.f32 %v1962, %v1975
    %v1977 = vpop.f32.mrf.mxu0
    %v1978 = vadd.f32 %v1964, %v1977
    %1979 = vdwg.mxu0
    %1980 = vmatpush.bf16.msra.mxu0 %v1642
    %1981 = vmatpush.bf16.msra.mxu0 %v1638
    %1982 = vmatpush.bf16.msra.mxu0 %v1634
    %1983 = vmatpush.bf16.msra.mxu0 %v1630
    %1984 = vmatpush.bf16.msra.mxu0 %v1626
    %1985 = vmatpush.bf16.msra.mxu0 %v1622
    %1986 = vmatpush.bf16.msra.mxu0 %v1618
    %1987 = vmatpush.bf16.msra.mxu0 %v1614
    %1988 = vmatmul.bf16.gmra.mxu0 %v1096
    %v1989 = vpop.f32.mrf.mxu0
    %v1990 = vadd.f32 0.0, %v1989
    %v1991 = vpop.f32.mrf.mxu0
    %v1992 = vadd.f32 0.0, %v1991
    %1993 = vdwg.mxu0
    %1994 = vmatpush.bf16.msra.mxu0 %v1674
    %1995 = vmatpush.bf16.msra.mxu0 %v1670
    %1996 = vmatpush.bf16.msra.mxu0 %v1666
    %1997 = vmatpush.bf16.msra.mxu0 %v1662
    %1998 = vmatpush.bf16.msra.mxu0 %v1658
    %1999 = vmatpush.bf16.msra.mxu0 %v1654
    %2000 = vmatpush.bf16.msra.mxu0 %v1650
    %2001 = vmatpush.bf16.msra.mxu0 %v1646
    %2002 = vmatmul.bf16.gmra.mxu0 %v1097
    %v2003 = vpop.f32.mrf.mxu0
    %v2004 = vadd.f32 %v1990, %v2003
    %v2005 = vpop.f32.mrf.mxu0
    %v2006 = vadd.f32 %v1992, %v2005
    %2007 = vdwg.mxu0
    %2008 = vmatpush.bf16.msra.mxu0 %v1706
    %2009 = vmatpush.bf16.msra.mxu0 %v1702
    %2010 = vmatpush.bf16.msra.mxu0 %v1698
    %2011 = vmatpush.bf16.msra.mxu0 %v1694
    %2012 = vmatpush.bf16.msra.mxu0 %v1690
    %2013 = vmatpush.bf16.msra.mxu0 %v1686
    %2014 = vmatpush.bf16.msra.mxu0 %v1682
    %2015 = vmatpush.bf16.msra.mxu0 %v1678
    %2016 = vmatmul.bf16.gmra.mxu0 %v1098
    %v2017 = vpop.f32.mrf.mxu0
    %v2018 = vadd.f32 %v2004, %v2017
    %v2019 = vpop.f32.mrf.mxu0
    %v2020 = vadd.f32 %v2006, %v2019
    %2021 = vdwg.mxu0
    %2022 = vmatpush.bf16.msra.mxu0 %v1738
    %2023 = vmatpush.bf16.msra.mxu0 %v1734
    %2024 = vmatpush.bf16.msra.mxu0 %v1730
    %2025 = vmatpush.bf16.msra.mxu0 %v1726
    %2026 = vmatpush.bf16.msra.mxu0 %v1722
    %2027 = vmatpush.bf16.msra.mxu0 %v1718
    %2028 = vmatpush.bf16.msra.mxu0 %v1714
    %2029 = vmatpush.bf16.msra.mxu0 %v1710
    %2030 = vmatmul.bf16.gmra.mxu0 %v1099
    %v2031 = vpop.f32.mrf.mxu0
    %v2032 = vadd.f32 %v2018, %v2031
    %v2033 = vpop.f32.mrf.mxu0
    %v2034 = vadd.f32 %v2020, %v2033
    %2035 = vdwg.mxu0
    %2036 = vmatpush.bf16.msra.mxu0 %v1643
    %2037 = vmatpush.bf16.msra.mxu0 %v1639
    %2038 = vmatpush.bf16.msra.mxu0 %v1635
    %2039 = vmatpush.bf16.msra.mxu0 %v1631
    %2040 = vmatpush.bf16.msra.mxu0 %v1627
    %2041 = vmatpush.bf16.msra.mxu0 %v1623
    %2042 = vmatpush.bf16.msra.mxu0 %v1619
    %2043 = vmatpush.bf16.msra.mxu0 %v1615
    %2044 = vmatmul.bf16.gmra.mxu0 %v1096
    %v2045 = vpop.f32.mrf.mxu0
    %v2046 = vadd.f32 0.0, %v2045
    %v2047 = vpop.f32.mrf.mxu0
    %v2048 = vadd.f32 0.0, %v2047
    %2049 = vdwg.mxu0
    %2050 = vmatpush.bf16.msra.mxu0 %v1675
    %2051 = vmatpush.bf16.msra.mxu0 %v1671
    %2052 = vmatpush.bf16.msra.mxu0 %v1667
    %2053 = vmatpush.bf16.msra.mxu0 %v1663
    %2054 = vmatpush.bf16.msra.mxu0 %v1659
    %2055 = vmatpush.bf16.msra.mxu0 %v1655
    %2056 = vmatpush.bf16.msra.mxu0 %v1651
    %2057 = vmatpush.bf16.msra.mxu0 %v1647
    %2058 = vmatmul.bf16.gmra.mxu0 %v1097
    %v2059 = vpop.f32.mrf.mxu0
    %v2060 = vadd.f32 %v2046, %v2059
    %v2061 = vpop.f32.mrf.mxu0
    %v2062 = vadd.f32 %v2048, %v2061
    %2063 = vdwg.mxu0
    %2064 = vmatpush.bf16.msra.mxu0 %v1707
    %2065 = vmatpush.bf16.msra.mxu0 %v1703
    %2066 = vmatpush.bf16.msra.mxu0 %v1699
    %2067 = vmatpush.bf16.msra.mxu0 %v1695
    %2068 = vmatpush.bf16.msra.mxu0 %v1691
    %2069 = vmatpush.bf16.msra.mxu0 %v1687
    %2070 = vmatpush.bf16.msra.mxu0 %v1683
    %2071 = vmatpush.bf16.msra.mxu0 %v1679
    %2072 = vmatmul.bf16.gmra.mxu0 %v1098
    %v2073 = vpop.f32.mrf.mxu0
    %v2074 = vadd.f32 %v2060, %v2073
    %v2075 = vpop.f32.mrf.mxu0
    %v2076 = vadd.f32 %v2062, %v2075
    %2077 = vdwg.mxu0
    %2078 = vmatpush.bf16.msra.mxu0 %v1739
    %2079 = vmatpush.bf16.msra.mxu0 %v1735
    %2080 = vmatpush.bf16.msra.mxu0 %v1731
    %2081 = vmatpush.bf16.msra.mxu0 %v1727
    %2082 = vmatpush.bf16.msra.mxu0 %v1723
    %2083 = vmatpush.bf16.msra.mxu0 %v1719
    %2084 = vmatpush.bf16.msra.mxu0 %v1715
    %2085 = vmatpush.bf16.msra.mxu0 %v1711
    %2086 = vmatmul.bf16.gmra.mxu0 %v1099
    %v2087 = vpop.f32.mrf.mxu0
    %v2088 = vadd.f32 %v2074, %v2087
    %v2089 = vpop.f32.mrf.mxu0
    %v2090 = vadd.f32 %v2076, %v2089
    %2091 = vdwg.mxu0
    %v2092 = vpack.c.bf16 %v1976, %v1920
    %v2093 = vpack.c.bf16 %v2088, %v2032
    %v2094 = vpack.c.bf16 %v1978, %v1922
    %v2095 = vpack.c.bf16 %v2090, %v2034
    %2096 = vst [vmem:[#allocation4] sm:$0xff] %v2092
    %2097 = vst [vmem:[#allocation4 + $0x8] sm:$0xff] %v2093
    %2098 = vst [vmem:[#allocation4 + $0x10] sm:$0xff] %v2094
    %2099 = vst [vmem:[#allocation4 + $0x18] sm:$0xff] %v2095
    // Predicated region
    $region30: #{composite_forward.1} parent=1 // pred_check
      _
    $region31: #{composite_forward.1} parent=1 // pred_check_branch
      %2101 = sbr.rel (0) target = $region33
    $region32: #{composite_forward.1} parent=1 // pred_region
      %2103 = vsyncadd [#allocation3], 0
      %s2104 = sshll.u32 [#allocation2], 4
      %s2105 = int_to_ptr.vmem [resolvable:$true] %s2104
      %s2106 = sshll.u32 %s7, 4
      %s2107 = int_to_ptr.hbm [resolvable:$true] %s2106
      %2112 = dma.vmem_to_hbm [thread:$0]  %s2105, 512, %s2107, [#allocation3], 256, 256, 16
    $region33: #{composite_forward.1} parent=1 // pred_fallthru
      _
    // Predicated region
    $region34: #{composite_forward.1} parent=1 // pred_check
      _
    $region35: #{composite_forward.1} parent=1 // pred_check_branch
      %2114 = sbr.rel (0) target = $region37
    $region36: #{composite_forward.1} parent=1 // pred_region
      %2116 = vsyncadd [#allocation5], 0
      %s2117 = sshll.u32 [#allocation4], 4
      %s2118 = int_to_ptr.vmem [resolvable:$true] %s2117
      %s2119 = sshll.u32 %s8, 4
      %s2120 = int_to_ptr.hbm [resolvable:$true] %s2119
      %2125 = dma.vmem_to_hbm [thread:$0]  %s2118, 512, %s2120, [#allocation5], 256, 256, 16
    $region37: #{composite_forward.1} parent=1 // pred_fallthru
      _
    // Predicated region
    $region38: #{composite_forward.1} parent=1 // pred_check
      _
    $region39: #{composite_forward.1} parent=1 // pred_check_branch
      %2127 = sbr.rel (0) target = $region41
    $region40: #{composite_forward.1} parent=1 // pred_region
      %2129 = dma.done [#allocation3], 512
    $region41: #{composite_forward.1} parent=1 // pred_fallthru
      _
    // Predicated region
    $region42: #{composite_forward.1} parent=1 // pred_check
      _
    $region43: #{composite_forward.1} parent=1 // pred_check_branch
      %2131 = sbr.rel (0) target = $region45
    $region44: #{composite_forward.1} parent=1 // pred_region
      %2133 = dma.done [#allocation5], 512
    $region45: #{composite_forward.1} parent=1 // pred_fallthru
      _
    %2134 = vsyncpa [#allocation3], 1
    %2135 = vsyncpa [#allocation5], 1

</llo_original>
